<compile_context>
chip_gen: v5e
topology: v5e:2x2
jax: 0.10.0
libtpu: 0.0.40
codegen_flags: <defaults>
</compile_context>

<pallas_src>
import functools
import math

import numpy as np

import jax
import jax.numpy as jnp
from jax.experimental import pallas as pl
from jax.experimental.pallas import tpu as pltpu


_CONV_K, _CONV_STRIDE, _CONV_PAD = 4, 2, 1   # fixed encoder/decoder conv geometry
_MARGIN = 16                                 # lane margin for shifted tap reads (>= 9)


# ------------------------------------------------------------------ the kernel

def _vae_forward_kernel(pT_ref, wenc_ref, benc_ref, whead_ref, bhead_ref,
                        eps_ref, wzh_ref, bzh_ref, w9_ref, bdec_ref, mask_ref,
                        xflat_ref, mulv_ref,
                        hflat_s, shift_s,
                        *, batch, n_ch, s_sp, z_dim, margin):
    """Whole VAE forward for the full (tiny) batch in one kernel invocation.

    Layouts:
      pT_ref    : (Cin*k*k, B*S)   bf16   im2col patches, lane axis = B*S
      wenc_ref  : (Cout, Cin*k*k)  bf16
      whead_ref : (Cout*S, 2*Z)    f32    [Wmu | Wlogvar], NCHW feature order
      wzh_ref   : (Z, Cout*S)      f32
      w9_ref    : (4*Cout, 9*Cin)  bf16   pre-folded sub-pixel ConvT taps
      mask_ref  : (9, B*S)         f32    per-tap boundary-validity masks
      outputs   : xflat (4*Cout, B*S) f32, mulv (B, 2*Z) f32
    """
    bs = batch * s_sp
    map_w = math.isqrt(s_sp)

    # -------- encoder conv as ONE GEMM (lane axis = B*S), bias + ReLU --------
    h = jnp.dot(wenc_ref[...], pT_ref[...],
                preferred_element_type=jnp.float32)          # (Cout, B*S)
    h = jnp.maximum(h + benc_ref[...], 0.0)

    # -------- NCHW flatten via independent static VMEM stores -> (B, F) ------
    for b in range(batch):
        for c in range(n_ch):
            hflat_s[b:b + 1, c * s_sp:(c + 1) * s_sp] = \
                h[c:c + 1, b * s_sp:(b + 1) * s_sp]
    hflat = hflat_s[...]                                     # (B, Cout*S) f32

    # -------- concatenated [mu | logvar] head: ONE GEMM ----------------------
    mulv = jnp.dot(hflat, whead_ref[...],
                   preferred_element_type=jnp.float32) + bhead_ref[...]
    mulv_ref[...] = mulv                                     # (B, 2*Z)
    mu = mulv[:, :z_dim]
    lv = mulv[:, z_dim:]
    z = mu + eps_ref[...] * jnp.exp(0.5 * lv)                # (B, Z)

    # -------- fc_z_to_h: ONE GEMM ---------------------------------------------
    hdflat = jnp.dot(z, wzh_ref[...],
                     preferred_element_type=jnp.float32) + bzh_ref[...]   # (B, F)

    # -------- stage hd as (Cin, B*S) inside a zero-margined buffer ------------
    # Margins are zeroed once per call; the interior is fully overwritten, so the
    # per-tap mask-multiply below never touches stale data.
    shift_s[...] = jnp.zeros(shift_s.shape, shift_s.dtype)
    for b in range(batch):
        for c in range(n_ch):
            shift_s[c:c + 1, margin + b * s_sp: margin + (b + 1) * s_sp] = \
                hdflat[b:b + 1, c * s_sp:(c + 1) * s_sp]

    # -------- sub-pixel ConvTranspose: stack 9 masked shifts -> ONE GEMM ------
    pieces = []
    for t in range(9):
        dr, dc = t // 3 - 1, t % 3 - 1
        d = dr * map_w + dc
        sh = shift_s[:, margin + d: margin + d + bs]         # (Cin, B*S), static slice
        pieces.append(sh * mask_ref[t:t + 1, :])             # precomputed 0/1 mask
    xop = jnp.concatenate(pieces, axis=0).astype(jnp.bfloat16)   # (9*Cin, B*S)
    y = jnp.dot(w9_ref[...], xop,
                preferred_element_type=jnp.float32)          # (4*Cout, B*S)
    xflat_ref[...] = jnp.tanh(y + bdec_ref[...])


# ----------------------------------------------------------------- pallas glue

def _fused_forward_call(params, pT, eps, mask_bs):
    batch, z_dim = eps.shape
    n_ch = params["benc"].shape[0]
    s_sp = params["mask9"].shape[1]
    bs = batch * s_sp
    n_rows = params["w9f"].shape[0]

    kern = functools.partial(_vae_forward_kernel, batch=batch, n_ch=n_ch,
                             s_sp=s_sp, z_dim=z_dim, margin=_MARGIN)
    vmem = pl.BlockSpec(memory_space=pltpu.MemorySpace.VMEM)
    return pl.pallas_call(
        kern,
        out_shape=(jax.ShapeDtypeStruct((n_rows, bs), jnp.float32),
                   jax.ShapeDtypeStruct((batch, 2 * z_dim), jnp.float32)),
        in_specs=[vmem] * 11,
        out_specs=(vmem, vmem),
        scratch_shapes=[pltpu.VMEM((batch, n_ch * s_sp), jnp.float32),
                        pltpu.VMEM((n_ch, bs + 2 * _MARGIN), jnp.float32)],
    )(pT, params["wencT"], params["benc"], params["whead2"], params["bhead"],
      eps, params["wzh"], params["bzh"], params["w9f"], params["bdec16"],
      mask_bs)


def _im2col_T(x, k, stride, pad):
    """NCHW -> (B, Cin*k*k, OH*OW) patch slab (feature-major rows, matching the
    row-major reshape of a torch OIHW conv weight)."""
    x = jnp.pad(x, ((0, 0), (0, 0), (pad, pad), (pad, pad)))
    B, C, H, W = x.shape
    oh = (H - k) // stride + 1
    ow = (W - k) // stride + 1
    cols = []
    for i in range(k):
        for j in range(k):
            cols.append(x[:, :, i:i + stride * oh:stride, j:j + stride * ow:stride])
    p = jnp.stack(cols, axis=2)                    # (B, C, k*k, oh, ow)
    return p.reshape(B, C * k * k, oh * ow)        # rows ordered (ci, kr, kc)


def _forward_impl(params, x, eps):
    B, _, H, W = x.shape
    z_dim = eps.shape[1]

    patches = _im2col_T(x, _CONV_K, _CONV_STRIDE, _CONV_PAD)        # (B, K, S)
    K, S = patches.shape[1], patches.shape[2]
    pT = jnp.transpose(patches, (1, 0, 2)).reshape(K, B * S).astype(jnp.bfloat16)
    mask_bs = jnp.tile(params["mask9"], (1, B))                     # (9, B*S)

    xflat, mulv = _fused_forward_call(params, pT, eps, mask_bs)
    mu, lv = mulv[:, :z_dim], mulv[:, z_dim:]

    # pixel shuffle: rows are (phase_a, phase_b, co), lanes are (b, u, v)
    c_out = params["w9f"].shape[0] // (_CONV_STRIDE * _CONV_STRIDE)
    map_w = H // _CONV_STRIDE
    xr = xflat.reshape(_CONV_STRIDE, _CONV_STRIDE, c_out, B, map_w, map_w)
    xr = xr.transpose(3, 2, 4, 0, 5, 1).reshape(B, c_out, H, W)
    return xr, mu, lv


_forward_apply = jax.jit(_forward_impl)


# -------------------------------------------------------------- weight folding

def _build_subpixel_weights(dec_w, stride=2):
    """Torch ConvTranspose2d weight (Cin, Cout, 4, 4), stride 2, pad 1 ->
    per-window-offset sub-pixel weights W9[wr*3+wc, (a*2+b)*Cout+co, ci].

    Output phase (a, b) of the transposed conv is a stride-1 2x2 conv of the
    1-padded input; window offset (wr, wc) of the 3x3 neighbourhood maps to
    kernel tap (3+a-2*wr, 3+b-2*wc) when 0 <= wr-a <= 1 and 0 <= wc-b <= 1
    (otherwise that offset does not contribute to that phase)."""
    cin, cout, kh, kw = dec_w.shape
    assert (kh, kw, stride) == (4, 4, 2), "sub-pixel lowering specialised to k=4, s=2, p=1"
    w9 = np.zeros((9, stride * stride * cout, cin), np.float32)
    for wr in range(3):
        for wc in range(3):
            for a in range(stride):
                for b in range(stride):
                    if 0 <= wr - a <= 1 and 0 <= wc - b <= 1:
                        r = 3 + a - 2 * wr
                        q = 3 + b - 2 * wc
                        for co in range(cout):
                            w9[wr * 3 + wc, (a * 2 + b) * cout + co, :] = dec_w[:, co, r, q]
    return w9


def _build_tap_masks(feat_hw):
    """(9, feat_hw*feat_hw) 0/1 boundary-validity masks for the 3x3 tap window."""
    s_sp = feat_hw * feat_hw
    m = np.zeros((9, s_sp), np.float32)
    for t in range(9):
        dr, dc = t // 3 - 1, t % 3 - 1
        for s in range(s_sp):
            u, v = divmod(s, feat_hw)
            if 0 <= u + dr < feat_hw and 0 <= v + dc < feat_hw:
                m[t, s] = 1.0
    return m


# ------------------------------------------------------------------------ VAE

class VAEPallas:
    """Pallas-TPU VAE matching the PyTorch reference `VAE` forward semantics."""

    def __init__(self, key, in_channels=4, enc_channels=8, in_hw=16, z_dim=16, k=4):
        assert k == _CONV_K and in_hw % 2 == 0
        self.z_dim = z_dim
        feat_hw = in_hw // 2
        s_sp = feat_hw * feat_hw
        self.features_shape = (enc_channels, feat_hw, feat_hw)
        self.n_features = enc_channels * s_sp

        ks = jax.random.split(key, 10)
        sc = 0.05
        raw = dict(
            enc_w=jax.random.normal(ks[0], (enc_channels, in_channels, k, k), jnp.float32) * sc,
            enc_b=jax.random.normal(ks[1], (enc_channels,), jnp.float32) * sc,
            fc_mu_w=jax.random.normal(ks[2], (self.n_features, z_dim), jnp.float32) * sc,
            fc_mu_b=jax.random.normal(ks[3], (z_dim,), jnp.float32) * sc,
            fc_lv_w=jax.random.normal(ks[4], (self.n_features, z_dim), jnp.float32) * sc,
            fc_lv_b=jax.random.normal(ks[5], (z_dim,), jnp.float32) * sc,
            fc_zh_w=jax.random.normal(ks[6], (z_dim, self.n_features), jnp.float32) * sc,
            fc_zh_b=jax.random.normal(ks[7], (self.n_features,), jnp.float32) * sc,
            # torch ConvTranspose2d weight layout: (Cin, Cout, kH, kW)
            dec_w=jax.random.normal(ks[8], (enc_channels, in_channels, k, k), jnp.float32) * sc,
            dec_b=jax.random.normal(ks[9], (in_channels,), jnp.float32) * sc,
        )
        self.raw = raw                      # original-layout f32 (reference / export)

        # ---- kernel-ready parameters: all re-layouts folded once at init
        bf = jnp.bfloat16
        wcat = jnp.concatenate([raw["fc_mu_w"], raw["fc_lv_w"]], axis=1)     # (F, 2Z) f32
        w9 = _build_subpixel_weights(np.asarray(jax.device_get(raw["dec_w"])),
                                     stride=_CONV_STRIDE)                    # (9, 4*Cout, Cin)
        w9f = w9.transpose(1, 0, 2).reshape(_CONV_STRIDE * _CONV_STRIDE * in_channels,
                                            9 * enc_channels)               # (4*Cout, 9*Cin)
        self.params = dict(
            # encoder conv as (Cout, Cin*k*k) GEMM weight (bf16 MXU operand)
            wencT=raw["enc_w"].reshape(enc_channels, in_channels * k * k).astype(bf),
            benc=raw["enc_b"].reshape(enc_channels, 1),
            # concatenated [mu | logvar] head, NCHW feature order (f32 on purpose)
            whead2=wcat,
            bhead=jnp.concatenate([raw["fc_mu_b"], raw["fc_lv_b"]]).reshape(1, 2 * z_dim),
            # fc_z_to_h, NCHW feature order (f32 on purpose)
            wzh=raw["fc_zh_w"],
            bzh=raw["fc_zh_b"].reshape(1, self.n_features),
            # sub-pixel ConvTranspose taps folded into one (4*Cout, 9*Cin) weight
            w9f=jnp.asarray(w9f).astype(bf),
            bdec16=jnp.tile(raw["dec_b"], _CONV_STRIDE * _CONV_STRIDE)
                      .reshape(_CONV_STRIDE * _CONV_STRIDE * in_channels, 1),
            # precomputed 3x3-tap boundary masks (per spatial position)
            mask9=jnp.asarray(_build_tap_masks(feat_hw)),
        )

    def forward(self, x, eps):
        return _forward_apply(self.params, x, eps)


# ------------------------------------------------------------------- reference

def _reference_forward(raw, x, eps):
    """Pure-JAX (XLA) f32 reference with identical forward semantics."""
    dn = ("NCHW", "OIHW", "NCHW")
    h = jax.lax.conv_general_dilated(x, raw["enc_w"], (2, 2), ((1, 1), (1, 1)),
                                     dimension_numbers=dn)
    h = jnp.maximum(h + raw["enc_b"][None, :, None, None], 0.0)
    hf = h.reshape(h.shape[0], -1)
    mu = hf @ raw["fc_mu_w"] + raw["fc_mu_b"]
    lv = hf @ raw["fc_lv_w"] + raw["fc_lv_b"]
    z = mu + eps * jnp.exp(0.5 * lv)
    hd = (z @ raw["fc_zh_w"] + raw["fc_zh_b"]).reshape((z.shape[0],) + h.shape[1:])
    # ConvTranspose2d(s=2, p=1, k=4) == lhs-dilated conv with flipped/swapped weights
    w_conv = jnp.flip(raw["dec_w"].transpose(1, 0, 2, 3), axis=(2, 3))
    xr = jax.lax.conv_general_dilated(hd, w_conv, (1, 1), ((2, 2), (2, 2)),
                                      lhs_dilation=(2, 2), dimension_numbers=dn)
    return jnp.tanh(xr + raw["dec_b"][None, :, None, None]), mu, lv


# ------------------------------------------------------------------------ main

if __name__ == "__main__":
    key = jax.random.PRNGKey(0)
    k_param, k_data, k_eps = jax.random.split(key, 3)

    B, C, H, W = 2, 4, 16, 16
    Z = 16
    model = VAEPallas(k_param, in_channels=C, enc_channels=8, in_hw=H, z_dim=Z)

    x = jax.random.normal(k_data, (B, C, H, W), jnp.float32)
    eps = jax.random.normal(k_eps, (B, Z), jnp.float32)

    x_rec, mu, log_sigma2 = model.forward(x, eps)
    x_rec = jax.block_until_ready(x_rec)
    mu = jax.block_until_ready(mu)
    log_sigma2 = jax.block_until_ready(log_sigma2)

    # shape / range sanity
    assert x_rec.shape == (B, C, H, W), x_rec.shape
    assert mu.shape == (B, Z) and log_sigma2.shape == (B, Z)
    assert bool(jnp.all(jnp.isfinite(x_rec)))
    assert bool(jnp.all(jnp.abs(x_rec) <= 1.0))          # tanh output range

    # numerics vs a pure-JAX f32 reference (conv GEMMs use bf16 MXU operands;
    # head / fc_z_to_h stay f32, so errors are dominated by the conv rounding)
    xr_ref, mu_ref, lv_ref = _reference_forward(model.raw, x, eps)
    for got, want, name in ((x_rec, xr_ref, "x_rec"), (mu, mu_ref, "mu"),
                            (log_sigma2, lv_ref, "log_sigma2")):
        err = float(jnp.max(jnp.abs(got - want)))
        assert err < 5e-2, f"{name} mismatch vs reference: max abs err {err}"

    print("KERNEL_OK")
</pallas_src>

<mosaic_0001>
module attributes {stable_mosaic.version = 11 : i64} {
  func.func @_vae_forward_kernel(%arg0: memref<64x128xbf16, #tpu.memory_space<vmem>>, %arg1: memref<8x64xbf16, #tpu.memory_space<vmem>>, %arg2: memref<8x1xf32, #tpu.memory_space<vmem>>, %arg3: memref<512x32xf32, #tpu.memory_space<vmem>>, %arg4: memref<1x32xf32, #tpu.memory_space<vmem>>, %arg5: memref<2x16xf32, #tpu.memory_space<vmem>>, %arg6: memref<16x512xf32, #tpu.memory_space<vmem>>, %arg7: memref<1x512xf32, #tpu.memory_space<vmem>>, %arg8: memref<16x72xbf16, #tpu.memory_space<vmem>>, %arg9: memref<16x1xf32, #tpu.memory_space<vmem>>, %arg10: memref<9x128xf32, #tpu.memory_space<vmem>>, %arg11: memref<16x128xf32, #tpu.memory_space<vmem>>, %arg12: memref<2x32xf32, #tpu.memory_space<vmem>>, %arg13: memref<2x512xf32, #tpu.memory_space<vmem>>, %arg14: memref<8x160xf32, #tpu.memory_space<vmem>>) attributes {dimension_semantics = [], scalar_prefetch = 0 : i64, scratch_operands = 2 : i64, tpu.core_type = #tpu.core_type<tc>} {
    %c0 = arith.constant 0 : index
    %c0_0 = arith.constant 0 : index
    %0 = vector.load %arg1[%c0, %c0_0] : memref<8x64xbf16, #tpu.memory_space<vmem>>, vector<8x64xbf16>
    %c0_1 = arith.constant 0 : index
    %c0_2 = arith.constant 0 : index
    %1 = vector.load %arg0[%c0_1, %c0_2] : memref<64x128xbf16, #tpu.memory_space<vmem>>, vector<64x128xbf16>
    %cst = arith.constant dense<0.000000e+00> : vector<8x128xf32>
    %2 = tpu.matmul %0, %1, %cst {dimension_numbers = #tpu.dot_dimension_numbers<[1], [0], [0], [1], [0, 0, 1, 1], [], []>} : vector<8x64xbf16>, vector<64x128xbf16>, vector<8x128xf32> -> vector<8x128xf32>
    %c0_3 = arith.constant 0 : index
    %c0_4 = arith.constant 0 : index
    %3 = vector.load %arg2[%c0_3, %c0_4] : memref<8x1xf32, #tpu.memory_space<vmem>>, vector<8x1xf32>
    %4 = vector.broadcast %3 : vector<8x1xf32> to vector<8x128xf32>
    %5 = arith.addf %2, %4 : vector<8x128xf32>
    %cst_5 = arith.constant 0.000000e+00 : f32
    %6 = vector.broadcast %cst_5 : f32 to vector<8x128xf32>
    %7 = arith.maximumf %5, %6 : vector<8x128xf32>
    %8 = vector.extract_strided_slice %7 {offsets = [0, 0], sizes = [1, 64], strides = [1, 1]} : vector<8x128xf32> to vector<1x64xf32>
    %c0_6 = arith.constant 0 : index
    %c0_7 = arith.constant 0 : index
    %9 = vector.load %arg13[%c0_6, %c0_7] : memref<2x512xf32, #tpu.memory_space<vmem>>, vector<1x64xf32>
    tpu.vector_store %arg13[%c0_6, %c0_7], %8 {strides = array<i32>} : memref<2x512xf32, #tpu.memory_space<vmem>>, vector<1x64xf32>,
    %10 = vector.extract_strided_slice %7 {offsets = [1, 0], sizes = [1, 64], strides = [1, 1]} : vector<8x128xf32> to vector<1x64xf32>
    %c0_8 = arith.constant 0 : index
    %c64 = arith.constant 64 : index
    %11 = vector.load %arg13[%c0_8, %c64] : memref<2x512xf32, #tpu.memory_space<vmem>>, vector<1x64xf32>
    tpu.vector_store %arg13[%c0_8, %c64], %10 {strides = array<i32>} : memref<2x512xf32, #tpu.memory_space<vmem>>, vector<1x64xf32>,
    %12 = vector.extract_strided_slice %7 {offsets = [2, 0], sizes = [1, 64], strides = [1, 1]} : vector<8x128xf32> to vector<1x64xf32>
    %c0_9 = arith.constant 0 : index
    %c128 = arith.constant 128 : index
    %13 = vector.load %arg13[%c0_9, %c128] : memref<2x512xf32, #tpu.memory_space<vmem>>, vector<1x64xf32>
    tpu.vector_store %arg13[%c0_9, %c128], %12 {strides = array<i32>} : memref<2x512xf32, #tpu.memory_space<vmem>>, vector<1x64xf32>,
    %14 = vector.extract_strided_slice %7 {offsets = [3, 0], sizes = [1, 64], strides = [1, 1]} : vector<8x128xf32> to vector<1x64xf32>
    %c0_10 = arith.constant 0 : index
    %c192 = arith.constant 192 : index
    %15 = vector.load %arg13[%c0_10, %c192] : memref<2x512xf32, #tpu.memory_space<vmem>>, vector<1x64xf32>
    tpu.vector_store %arg13[%c0_10, %c192], %14 {strides = array<i32>} : memref<2x512xf32, #tpu.memory_space<vmem>>, vector<1x64xf32>,
    %16 = vector.extract_strided_slice %7 {offsets = [4, 0], sizes = [1, 64], strides = [1, 1]} : vector<8x128xf32> to vector<1x64xf32>
    %c0_11 = arith.constant 0 : index
    %c256 = arith.constant 256 : index
    %17 = vector.load %arg13[%c0_11, %c256] : memref<2x512xf32, #tpu.memory_space<vmem>>, vector<1x64xf32>
    tpu.vector_store %arg13[%c0_11, %c256], %16 {strides = array<i32>} : memref<2x512xf32, #tpu.memory_space<vmem>>, vector<1x64xf32>,
    %18 = vector.extract_strided_slice %7 {offsets = [5, 0], sizes = [1, 64], strides = [1, 1]} : vector<8x128xf32> to vector<1x64xf32>
    %c0_12 = arith.constant 0 : index
    %c320 = arith.constant 320 : index
    %19 = vector.load %arg13[%c0_12, %c320] : memref<2x512xf32, #tpu.memory_space<vmem>>, vector<1x64xf32>
    tpu.vector_store %arg13[%c0_12, %c320], %18 {strides = array<i32>} : memref<2x512xf32, #tpu.memory_space<vmem>>, vector<1x64xf32>,
    %20 = vector.extract_strided_slice %7 {offsets = [6, 0], sizes = [1, 64], strides = [1, 1]} : vector<8x128xf32> to vector<1x64xf32>
    %c0_13 = arith.constant 0 : index
    %c384 = arith.constant 384 : index
    %21 = vector.load %arg13[%c0_13, %c384] : memref<2x512xf32, #tpu.memory_space<vmem>>, vector<1x64xf32>
    tpu.vector_store %arg13[%c0_13, %c384], %20 {strides = array<i32>} : memref<2x512xf32, #tpu.memory_space<vmem>>, vector<1x64xf32>,
    %22 = vector.extract_strided_slice %7 {offsets = [7, 0], sizes = [1, 64], strides = [1, 1]} : vector<8x128xf32> to vector<1x64xf32>
    %c0_14 = arith.constant 0 : index
    %c448 = arith.constant 448 : index
    %23 = vector.load %arg13[%c0_14, %c448] : memref<2x512xf32, #tpu.memory_space<vmem>>, vector<1x64xf32>
    tpu.vector_store %arg13[%c0_14, %c448], %22 {strides = array<i32>} : memref<2x512xf32, #tpu.memory_space<vmem>>, vector<1x64xf32>,
    %24 = vector.extract_strided_slice %7 {offsets = [0, 64], sizes = [1, 64], strides = [1, 1]} : vector<8x128xf32> to vector<1x64xf32>
    %c1 = arith.constant 1 : index
    %c0_15 = arith.constant 0 : index
    %25 = vector.load %arg13[%c1, %c0_15] : memref<2x512xf32, #tpu.memory_space<vmem>>, vector<1x64xf32>
    tpu.vector_store %arg13[%c1, %c0_15], %24 {strides = array<i32>} : memref<2x512xf32, #tpu.memory_space<vmem>>, vector<1x64xf32>,
    %26 = vector.extract_strided_slice %7 {offsets = [1, 64], sizes = [1, 64], strides = [1, 1]} : vector<8x128xf32> to vector<1x64xf32>
    %c1_16 = arith.constant 1 : index
    %c64_17 = arith.constant 64 : index
    %27 = vector.load %arg13[%c1_16, %c64_17] : memref<2x512xf32, #tpu.memory_space<vmem>>, vector<1x64xf32>
    tpu.vector_store %arg13[%c1_16, %c64_17], %26 {strides = array<i32>} : memref<2x512xf32, #tpu.memory_space<vmem>>, vector<1x64xf32>,
    %28 = vector.extract_strided_slice %7 {offsets = [2, 64], sizes = [1, 64], strides = [1, 1]} : vector<8x128xf32> to vector<1x64xf32>
    %c1_18 = arith.constant 1 : index
    %c128_19 = arith.constant 128 : index
    %29 = vector.load %arg13[%c1_18, %c128_19] : memref<2x512xf32, #tpu.memory_space<vmem>>, vector<1x64xf32>
    tpu.vector_store %arg13[%c1_18, %c128_19], %28 {strides = array<i32>} : memref<2x512xf32, #tpu.memory_space<vmem>>, vector<1x64xf32>,
    %30 = vector.extract_strided_slice %7 {offsets = [3, 64], sizes = [1, 64], strides = [1, 1]} : vector<8x128xf32> to vector<1x64xf32>
    %c1_20 = arith.constant 1 : index
    %c192_21 = arith.constant 192 : index
    %31 = vector.load %arg13[%c1_20, %c192_21] : memref<2x512xf32, #tpu.memory_space<vmem>>, vector<1x64xf32>
    tpu.vector_store %arg13[%c1_20, %c192_21], %30 {strides = array<i32>} : memref<2x512xf32, #tpu.memory_space<vmem>>, vector<1x64xf32>,
    %32 = vector.extract_strided_slice %7 {offsets = [4, 64], sizes = [1, 64], strides = [1, 1]} : vector<8x128xf32> to vector<1x64xf32>
    %c1_22 = arith.constant 1 : index
    %c256_23 = arith.constant 256 : index
    %33 = vector.load %arg13[%c1_22, %c256_23] : memref<2x512xf32, #tpu.memory_space<vmem>>, vector<1x64xf32>
    tpu.vector_store %arg13[%c1_22, %c256_23], %32 {strides = array<i32>} : memref<2x512xf32, #tpu.memory_space<vmem>>, vector<1x64xf32>,
    %34 = vector.extract_strided_slice %7 {offsets = [5, 64], sizes = [1, 64], strides = [1, 1]} : vector<8x128xf32> to vector<1x64xf32>
    %c1_24 = arith.constant 1 : index
    %c320_25 = arith.constant 320 : index
    %35 = vector.load %arg13[%c1_24, %c320_25] : memref<2x512xf32, #tpu.memory_space<vmem>>, vector<1x64xf32>
    tpu.vector_store %arg13[%c1_24, %c320_25], %34 {strides = array<i32>} : memref<2x512xf32, #tpu.memory_space<vmem>>, vector<1x64xf32>,
    %36 = vector.extract_strided_slice %7 {offsets = [6, 64], sizes = [1, 64], strides = [1, 1]} : vector<8x128xf32> to vector<1x64xf32>
    %c1_26 = arith.constant 1 : index
    %c384_27 = arith.constant 384 : index
    %37 = vector.load %arg13[%c1_26, %c384_27] : memref<2x512xf32, #tpu.memory_space<vmem>>, vector<1x64xf32>
    tpu.vector_store %arg13[%c1_26, %c384_27], %36 {strides = array<i32>} : memref<2x512xf32, #tpu.memory_space<vmem>>, vector<1x64xf32>,
    %38 = vector.extract_strided_slice %7 {offsets = [7, 64], sizes = [1, 64], strides = [1, 1]} : vector<8x128xf32> to vector<1x64xf32>
    %c1_28 = arith.constant 1 : index
    %c448_29 = arith.constant 448 : index
    %39 = vector.load %arg13[%c1_28, %c448_29] : memref<2x512xf32, #tpu.memory_space<vmem>>, vector<1x64xf32>
    tpu.vector_store %arg13[%c1_28, %c448_29], %38 {strides = array<i32>} : memref<2x512xf32, #tpu.memory_space<vmem>>, vector<1x64xf32>,
    %c0_30 = arith.constant 0 : index
    %c0_31 = arith.constant 0 : index
    %40 = vector.load %arg13[%c0_30, %c0_31] : memref<2x512xf32, #tpu.memory_space<vmem>>, vector<2x512xf32>
    %c0_32 = arith.constant 0 : index
    %c0_33 = arith.constant 0 : index
    %41 = vector.load %arg3[%c0_32, %c0_33] : memref<512x32xf32, #tpu.memory_space<vmem>>, vector<512x32xf32>
    %cst_34 = arith.constant dense<0.000000e+00> : vector<2x32xf32>
    %42 = tpu.matmul %40, %41, %cst_34 {dimension_numbers = #tpu.dot_dimension_numbers<[1], [0], [0], [1], [0, 0, 1, 1], [], []>} : vector<2x512xf32>, vector<512x32xf32>, vector<2x32xf32> -> vector<2x32xf32>
    %c0_35 = arith.constant 0 : index
    %c0_36 = arith.constant 0 : index
    %43 = vector.load %arg4[%c0_35, %c0_36] : memref<1x32xf32, #tpu.memory_space<vmem>>, vector<1x32xf32>
    %44 = vector.broadcast %43 : vector<1x32xf32> to vector<2x32xf32>
    %45 = arith.addf %42, %44 : vector<2x32xf32>
    %c0_37 = arith.constant 0 : index
    %c0_38 = arith.constant 0 : index
    %46 = vector.load %arg12[%c0_37, %c0_38] : memref<2x32xf32, #tpu.memory_space<vmem>>, vector<2x32xf32>
    tpu.vector_store %arg12[%c0_37, %c0_38], %45 {strides = array<i32>} : memref<2x32xf32, #tpu.memory_space<vmem>>, vector<2x32xf32>,
    %47 = vector.extract_strided_slice %45 {offsets = [0, 0], sizes = [2, 16], strides = [1, 1]} : vector<2x32xf32> to vector<2x16xf32>
    %48 = vector.extract_strided_slice %45 {offsets = [0, 16], sizes = [2, 16], strides = [1, 1]} : vector<2x32xf32> to vector<2x16xf32>
    %c0_39 = arith.constant 0 : index
    %c0_40 = arith.constant 0 : index
    %49 = vector.load %arg5[%c0_39, %c0_40] : memref<2x16xf32, #tpu.memory_space<vmem>>, vector<2x16xf32>
    %cst_41 = arith.constant 5.000000e-01 : f32
    %50 = vector.broadcast %cst_41 : f32 to vector<2x16xf32>
    %51 = arith.mulf %50, %48 : vector<2x16xf32>
    %52 = math.exp %51 : vector<2x16xf32>
    %53 = arith.mulf %49, %52 : vector<2x16xf32>
    %54 = arith.addf %47, %53 : vector<2x16xf32>
    %c0_42 = arith.constant 0 : index
    %c0_43 = arith.constant 0 : index
    %55 = vector.load %arg6[%c0_42, %c0_43] : memref<16x512xf32, #tpu.memory_space<vmem>>, vector<16x512xf32>
    %cst_44 = arith.constant dense<0.000000e+00> : vector<2x512xf32>
    %56 = tpu.matmul %54, %55, %cst_44 {dimension_numbers = #tpu.dot_dimension_numbers<[1], [0], [0], [1], [0, 0, 1, 1], [], []>} : vector<2x16xf32>, vector<16x512xf32>, vector<2x512xf32> -> vector<2x512xf32>
    %c0_45 = arith.constant 0 : index
    %c0_46 = arith.constant 0 : index
    %57 = vector.load %arg7[%c0_45, %c0_46] : memref<1x512xf32, #tpu.memory_space<vmem>>, vector<1x512xf32>
    %58 = vector.broadcast %57 : vector<1x512xf32> to vector<2x512xf32>
    %59 = arith.addf %56, %58 : vector<2x512xf32>
    %cst_47 = arith.constant 0.000000e+00 : f32
    %60 = vector.broadcast %cst_47 : f32 to vector<8x160xf32>
    %c0_48 = arith.constant 0 : index
    %c0_49 = arith.constant 0 : index
    %61 = vector.load %arg14[%c0_48, %c0_49] : memref<8x160xf32, #tpu.memory_space<vmem>>, vector<8x160xf32>
    tpu.vector_store %arg14[%c0_48, %c0_49], %60 {strides = array<i32>} : memref<8x160xf32, #tpu.memory_space<vmem>>, vector<8x160xf32>,
    %62 = vector.extract_strided_slice %59 {offsets = [0, 0], sizes = [1, 64], strides = [1, 1]} : vector<2x512xf32> to vector<1x64xf32>
    %c0_50 = arith.constant 0 : index
    %c16 = arith.constant 16 : index
    %63 = vector.load %arg14[%c0_50, %c16] : memref<8x160xf32, #tpu.memory_space<vmem>>, vector<1x64xf32>
    tpu.vector_store %arg14[%c0_50, %c16], %62 {strides = array<i32>} : memref<8x160xf32, #tpu.memory_space<vmem>>, vector<1x64xf32>,
    %64 = vector.extract_strided_slice %59 {offsets = [0, 64], sizes = [1, 64], strides = [1, 1]} : vector<2x512xf32> to vector<1x64xf32>
    %c1_51 = arith.constant 1 : index
    %c16_52 = arith.constant 16 : index
    %65 = vector.load %arg14[%c1_51, %c16_52] : memref<8x160xf32, #tpu.memory_space<vmem>>, vector<1x64xf32>
    tpu.vector_store %arg14[%c1_51, %c16_52], %64 {strides = array<i32>} : memref<8x160xf32, #tpu.memory_space<vmem>>, vector<1x64xf32>,
    %66 = vector.extract_strided_slice %59 {offsets = [0, 128], sizes = [1, 64], strides = [1, 1]} : vector<2x512xf32> to vector<1x64xf32>
    %c2 = arith.constant 2 : index
    %c16_53 = arith.constant 16 : index
    %67 = vector.load %arg14[%c2, %c16_53] : memref<8x160xf32, #tpu.memory_space<vmem>>, vector<1x64xf32>
    tpu.vector_store %arg14[%c2, %c16_53], %66 {strides = array<i32>} : memref<8x160xf32, #tpu.memory_space<vmem>>, vector<1x64xf32>,
    %68 = vector.extract_strided_slice %59 {offsets = [0, 192], sizes = [1, 64], strides = [1, 1]} : vector<2x512xf32> to vector<1x64xf32>
    %c3 = arith.constant 3 : index
    %c16_54 = arith.constant 16 : index
    %69 = vector.load %arg14[%c3, %c16_54] : memref<8x160xf32, #tpu.memory_space<vmem>>, vector<1x64xf32>
    tpu.vector_store %arg14[%c3, %c16_54], %68 {strides = array<i32>} : memref<8x160xf32, #tpu.memory_space<vmem>>, vector<1x64xf32>,
    %70 = vector.extract_strided_slice %59 {offsets = [0, 256], sizes = [1, 64], strides = [1, 1]} : vector<2x512xf32> to vector<1x64xf32>
    %c4 = arith.constant 4 : index
    %c16_55 = arith.constant 16 : index
    %71 = vector.load %arg14[%c4, %c16_55] : memref<8x160xf32, #tpu.memory_space<vmem>>, vector<1x64xf32>
    tpu.vector_store %arg14[%c4, %c16_55], %70 {strides = array<i32>} : memref<8x160xf32, #tpu.memory_space<vmem>>, vector<1x64xf32>,
    %72 = vector.extract_strided_slice %59 {offsets = [0, 320], sizes = [1, 64], strides = [1, 1]} : vector<2x512xf32> to vector<1x64xf32>
    %c5 = arith.constant 5 : index
    %c16_56 = arith.constant 16 : index
    %73 = vector.load %arg14[%c5, %c16_56] : memref<8x160xf32, #tpu.memory_space<vmem>>, vector<1x64xf32>
    tpu.vector_store %arg14[%c5, %c16_56], %72 {strides = array<i32>} : memref<8x160xf32, #tpu.memory_space<vmem>>, vector<1x64xf32>,
    %74 = vector.extract_strided_slice %59 {offsets = [0, 384], sizes = [1, 64], strides = [1, 1]} : vector<2x512xf32> to vector<1x64xf32>
    %c6 = arith.constant 6 : index
    %c16_57 = arith.constant 16 : index
    %75 = vector.load %arg14[%c6, %c16_57] : memref<8x160xf32, #tpu.memory_space<vmem>>, vector<1x64xf32>
    tpu.vector_store %arg14[%c6, %c16_57], %74 {strides = array<i32>} : memref<8x160xf32, #tpu.memory_space<vmem>>, vector<1x64xf32>,
    %76 = vector.extract_strided_slice %59 {offsets = [0, 448], sizes = [1, 64], strides = [1, 1]} : vector<2x512xf32> to vector<1x64xf32>
    %c7 = arith.constant 7 : index
    %c16_58 = arith.constant 16 : index
    %77 = vector.load %arg14[%c7, %c16_58] : memref<8x160xf32, #tpu.memory_space<vmem>>, vector<1x64xf32>
    tpu.vector_store %arg14[%c7, %c16_58], %76 {strides = array<i32>} : memref<8x160xf32, #tpu.memory_space<vmem>>, vector<1x64xf32>,
    %78 = vector.extract_strided_slice %59 {offsets = [1, 0], sizes = [1, 64], strides = [1, 1]} : vector<2x512xf32> to vector<1x64xf32>
    %c0_59 = arith.constant 0 : index
    %c80 = arith.constant 80 : index
    %79 = vector.load %arg14[%c0_59, %c80] : memref<8x160xf32, #tpu.memory_space<vmem>>, vector<1x64xf32>
    tpu.vector_store %arg14[%c0_59, %c80], %78 {strides = array<i32>} : memref<8x160xf32, #tpu.memory_space<vmem>>, vector<1x64xf32>,
    %80 = vector.extract_strided_slice %59 {offsets = [1, 64], sizes = [1, 64], strides = [1, 1]} : vector<2x512xf32> to vector<1x64xf32>
    %c1_60 = arith.constant 1 : index
    %c80_61 = arith.constant 80 : index
    %81 = vector.load %arg14[%c1_60, %c80_61] : memref<8x160xf32, #tpu.memory_space<vmem>>, vector<1x64xf32>
    tpu.vector_store %arg14[%c1_60, %c80_61], %80 {strides = array<i32>} : memref<8x160xf32, #tpu.memory_space<vmem>>, vector<1x64xf32>,
    %82 = vector.extract_strided_slice %59 {offsets = [1, 128], sizes = [1, 64], strides = [1, 1]} : vector<2x512xf32> to vector<1x64xf32>
    %c2_62 = arith.constant 2 : index
    %c80_63 = arith.constant 80 : index
    %83 = vector.load %arg14[%c2_62, %c80_63] : memref<8x160xf32, #tpu.memory_space<vmem>>, vector<1x64xf32>
    tpu.vector_store %arg14[%c2_62, %c80_63], %82 {strides = array<i32>} : memref<8x160xf32, #tpu.memory_space<vmem>>, vector<1x64xf32>,
    %84 = vector.extract_strided_slice %59 {offsets = [1, 192], sizes = [1, 64], strides = [1, 1]} : vector<2x512xf32> to vector<1x64xf32>
    %c3_64 = arith.constant 3 : index
    %c80_65 = arith.constant 80 : index
    %85 = vector.load %arg14[%c3_64, %c80_65] : memref<8x160xf32, #tpu.memory_space<vmem>>, vector<1x64xf32>
    tpu.vector_store %arg14[%c3_64, %c80_65], %84 {strides = array<i32>} : memref<8x160xf32, #tpu.memory_space<vmem>>, vector<1x64xf32>,
    %86 = vector.extract_strided_slice %59 {offsets = [1, 256], sizes = [1, 64], strides = [1, 1]} : vector<2x512xf32> to vector<1x64xf32>
    %c4_66 = arith.constant 4 : index
    %c80_67 = arith.constant 80 : index
    %87 = vector.load %arg14[%c4_66, %c80_67] : memref<8x160xf32, #tpu.memory_space<vmem>>, vector<1x64xf32>
    tpu.vector_store %arg14[%c4_66, %c80_67], %86 {strides = array<i32>} : memref<8x160xf32, #tpu.memory_space<vmem>>, vector<1x64xf32>,
    %88 = vector.extract_strided_slice %59 {offsets = [1, 320], sizes = [1, 64], strides = [1, 1]} : vector<2x512xf32> to vector<1x64xf32>
    %c5_68 = arith.constant 5 : index
    %c80_69 = arith.constant 80 : index
    %89 = vector.load %arg14[%c5_68, %c80_69] : memref<8x160xf32, #tpu.memory_space<vmem>>, vector<1x64xf32>
    tpu.vector_store %arg14[%c5_68, %c80_69], %88 {strides = array<i32>} : memref<8x160xf32, #tpu.memory_space<vmem>>, vector<1x64xf32>,
    %90 = vector.extract_strided_slice %59 {offsets = [1, 384], sizes = [1, 64], strides = [1, 1]} : vector<2x512xf32> to vector<1x64xf32>
    %c6_70 = arith.constant 6 : index
    %c80_71 = arith.constant 80 : index
    %91 = vector.load %arg14[%c6_70, %c80_71] : memref<8x160xf32, #tpu.memory_space<vmem>>, vector<1x64xf32>
    tpu.vector_store %arg14[%c6_70, %c80_71], %90 {strides = array<i32>} : memref<8x160xf32, #tpu.memory_space<vmem>>, vector<1x64xf32>,
    %92 = vector.extract_strided_slice %59 {offsets = [1, 448], sizes = [1, 64], strides = [1, 1]} : vector<2x512xf32> to vector<1x64xf32>
    %c7_72 = arith.constant 7 : index
    %c80_73 = arith.constant 80 : index
    %93 = vector.load %arg14[%c7_72, %c80_73] : memref<8x160xf32, #tpu.memory_space<vmem>>, vector<1x64xf32>
    tpu.vector_store %arg14[%c7_72, %c80_73], %92 {strides = array<i32>} : memref<8x160xf32, #tpu.memory_space<vmem>>, vector<1x64xf32>,
    %c0_74 = arith.constant 0 : index
    %c7_75 = arith.constant 7 : index
    %94 = vector.load %arg14[%c0_74, %c7_75] : memref<8x160xf32, #tpu.memory_space<vmem>>, vector<8x128xf32>
    %c0_76 = arith.constant 0 : index
    %c0_77 = arith.constant 0 : index
    %95 = vector.load %arg10[%c0_76, %c0_77] : memref<9x128xf32, #tpu.memory_space<vmem>>, vector<1x128xf32>
    %96 = vector.broadcast %95 : vector<1x128xf32> to vector<8x128xf32>
    %97 = arith.mulf %94, %96 : vector<8x128xf32>
    %c0_78 = arith.constant 0 : index
    %c8 = arith.constant 8 : index
    %98 = vector.load %arg14[%c0_78, %c8] : memref<8x160xf32, #tpu.memory_space<vmem>>, vector<8x128xf32>
    %c1_79 = arith.constant 1 : index
    %c0_80 = arith.constant 0 : index
    %99 = vector.load %arg10[%c1_79, %c0_80] : memref<9x128xf32, #tpu.memory_space<vmem>>, vector<1x128xf32>
    %100 = vector.broadcast %99 : vector<1x128xf32> to vector<8x128xf32>
    %101 = arith.mulf %98, %100 : vector<8x128xf32>
    %c0_81 = arith.constant 0 : index
    %c9 = arith.constant 9 : index
    %102 = vector.load %arg14[%c0_81, %c9] : memref<8x160xf32, #tpu.memory_space<vmem>>, vector<8x128xf32>
    %c2_82 = arith.constant 2 : index
    %c0_83 = arith.constant 0 : index
    %103 = vector.load %arg10[%c2_82, %c0_83] : memref<9x128xf32, #tpu.memory_space<vmem>>, vector<1x128xf32>
    %104 = vector.broadcast %103 : vector<1x128xf32> to vector<8x128xf32>
    %105 = arith.mulf %102, %104 : vector<8x128xf32>
    %c0_84 = arith.constant 0 : index
    %c15 = arith.constant 15 : index
    %106 = vector.load %arg14[%c0_84, %c15] : memref<8x160xf32, #tpu.memory_space<vmem>>, vector<8x128xf32>
    %c3_85 = arith.constant 3 : index
    %c0_86 = arith.constant 0 : index
    %107 = vector.load %arg10[%c3_85, %c0_86] : memref<9x128xf32, #tpu.memory_space<vmem>>, vector<1x128xf32>
    %108 = vector.broadcast %107 : vector<1x128xf32> to vector<8x128xf32>
    %109 = arith.mulf %106, %108 : vector<8x128xf32>
    %c0_87 = arith.constant 0 : index
    %c16_88 = arith.constant 16 : index
    %110 = vector.load %arg14[%c0_87, %c16_88] : memref<8x160xf32, #tpu.memory_space<vmem>>, vector<8x128xf32>
    %c4_89 = arith.constant 4 : index
    %c0_90 = arith.constant 0 : index
    %111 = vector.load %arg10[%c4_89, %c0_90] : memref<9x128xf32, #tpu.memory_space<vmem>>, vector<1x128xf32>
    %112 = vector.broadcast %111 : vector<1x128xf32> to vector<8x128xf32>
    %113 = arith.mulf %110, %112 : vector<8x128xf32>
    %c0_91 = arith.constant 0 : index
    %c17 = arith.constant 17 : index
    %114 = vector.load %arg14[%c0_91, %c17] : memref<8x160xf32, #tpu.memory_space<vmem>>, vector<8x128xf32>
    %c5_92 = arith.constant 5 : index
    %c0_93 = arith.constant 0 : index
    %115 = vector.load %arg10[%c5_92, %c0_93] : memref<9x128xf32, #tpu.memory_space<vmem>>, vector<1x128xf32>
    %116 = vector.broadcast %115 : vector<1x128xf32> to vector<8x128xf32>
    %117 = arith.mulf %114, %116 : vector<8x128xf32>
    %c0_94 = arith.constant 0 : index
    %c23 = arith.constant 23 : index
    %118 = vector.load %arg14[%c0_94, %c23] : memref<8x160xf32, #tpu.memory_space<vmem>>, vector<8x128xf32>
    %c6_95 = arith.constant 6 : index
    %c0_96 = arith.constant 0 : index
    %119 = vector.load %arg10[%c6_95, %c0_96] : memref<9x128xf32, #tpu.memory_space<vmem>>, vector<1x128xf32>
    %120 = vector.broadcast %119 : vector<1x128xf32> to vector<8x128xf32>
    %121 = arith.mulf %118, %120 : vector<8x128xf32>
    %c0_97 = arith.constant 0 : index
    %c24 = arith.constant 24 : index
    %122 = vector.load %arg14[%c0_97, %c24] : memref<8x160xf32, #tpu.memory_space<vmem>>, vector<8x128xf32>
    %c7_98 = arith.constant 7 : index
    %c0_99 = arith.constant 0 : index
    %123 = vector.load %arg10[%c7_98, %c0_99] : memref<9x128xf32, #tpu.memory_space<vmem>>, vector<1x128xf32>
    %124 = vector.broadcast %123 : vector<1x128xf32> to vector<8x128xf32>
    %125 = arith.mulf %122, %124 : vector<8x128xf32>
    %c0_100 = arith.constant 0 : index
    %c25 = arith.constant 25 : index
    %126 = vector.load %arg14[%c0_100, %c25] : memref<8x160xf32, #tpu.memory_space<vmem>>, vector<8x128xf32>
    %c8_101 = arith.constant 8 : index
    %c0_102 = arith.constant 0 : index
    %127 = vector.load %arg10[%c8_101, %c0_102] : memref<9x128xf32, #tpu.memory_space<vmem>>, vector<1x128xf32>
    %128 = vector.broadcast %127 : vector<1x128xf32> to vector<8x128xf32>
    %129 = arith.mulf %126, %128 : vector<8x128xf32>
    %130 = tpu.concatenate %97, %101, %105, %109, %113, %117, %121, %125, %129 in 0 : vector<8x128xf32>, vector<8x128xf32>, vector<8x128xf32>, vector<8x128xf32>, vector<8x128xf32>, vector<8x128xf32>, vector<8x128xf32>, vector<8x128xf32>, vector<8x128xf32> -> vector<72x128xf32>
    %131 = arith.truncf %130 : vector<72x128xf32> to vector<72x128xbf16>
    %c0_103 = arith.constant 0 : index
    %c0_104 = arith.constant 0 : index
    %132 = vector.load %arg8[%c0_103, %c0_104] : memref<16x72xbf16, #tpu.memory_space<vmem>>, vector<16x72xbf16>
    %cst_105 = arith.constant dense<0.000000e+00> : vector<16x128xf32>
    %133 = tpu.matmul %132, %131, %cst_105 {dimension_numbers = #tpu.dot_dimension_numbers<[1], [0], [0], [1], [0, 0, 1, 1], [], []>} : vector<16x72xbf16>, vector<72x128xbf16>, vector<16x128xf32> -> vector<16x128xf32>
    %c0_106 = arith.constant 0 : index
    %c0_107 = arith.constant 0 : index
    %134 = vector.load %arg9[%c0_106, %c0_107] : memref<16x1xf32, #tpu.memory_space<vmem>>, vector<16x1xf32>
    %135 = vector.broadcast %134 : vector<16x1xf32> to vector<16x128xf32>
    %136 = arith.addf %133, %135 : vector<16x128xf32>
    %137 = math.tanh %136 : vector<16x128xf32>
    %c0_108 = arith.constant 0 : index
    %c0_109 = arith.constant 0 : index
    %138 = vector.load %arg11[%c0_108, %c0_109] : memref<16x128xf32, #tpu.memory_space<vmem>>, vector<16x128xf32>
    tpu.vector_store %arg11[%c0_108, %c0_109], %137 {strides = array<i32>} : memref<16x128xf32, #tpu.memory_space<vmem>>, vector<16x128xf32>,
    return
  }
}

</mosaic_0001>

<llo_original>
// kernel: tile.9
$region0: #{tile.9}
  %s0 = inlined_call_operand.vmem [shape: f32[9,2,64], index: 0, kind: input, shape index: {}]
  %s1 = inlined_call_operand.vmem [shape: f32[9,128], index: 1, kind: output, shape index: {}]
  $region1: #{tile.9} parent=0
    #allocation0 [shape = 'u8[36864]{0}', space=vmem, size = 0x9000, scoped, tag = 'scoped mem for input reshape']
    %s3 = ssub.s32 4, 1
    %s4 = scalar_lea.vmem %s0, 16
    %v5 = vld [vmem:[%s4] sm:%s3]
    %s6 = scalar_lea.vmem [#allocation0], 64
    %7 = vst [vmem:[%s6] sm:%s3] %v5
    %s8 = scalar_lea.vmem %s0, 14
    %v9 = vld [vmem:[%s8] sm:%s3]
    %s10 = scalar_lea.vmem [#allocation0], 56
    %11 = vst [vmem:[%s10] sm:%s3] %v9
    %s12 = scalar_lea.vmem %s0, 12
    %v13 = vld [vmem:[%s12] sm:%s3]
    %s14 = scalar_lea.vmem [#allocation0], 48
    %15 = vst [vmem:[%s14] sm:%s3] %v13
    %s16 = scalar_lea.vmem %s0, 10
    %v17 = vld [vmem:[%s16] sm:%s3]
    %s18 = scalar_lea.vmem [#allocation0], 40
    %19 = vst [vmem:[%s18] sm:%s3] %v17
    %s20 = scalar_lea.vmem %s0, 8
    %v21 = vld [vmem:[%s20] sm:%s3]
    %s22 = scalar_lea.vmem [#allocation0], 32
    %23 = vst [vmem:[%s22] sm:%s3] %v21
    %s24 = scalar_lea.vmem %s0, 6
    %v25 = vld [vmem:[%s24] sm:%s3]
    %s26 = scalar_lea.vmem [#allocation0], 24
    %27 = vst [vmem:[%s26] sm:%s3] %v25
    %s28 = scalar_lea.vmem %s0, 4
    %v29 = vld [vmem:[%s28] sm:%s3]
    %s30 = scalar_lea.vmem [#allocation0], 16
    %31 = vst [vmem:[%s30] sm:%s3] %v29
    %s32 = scalar_lea.vmem %s0, 2
    %v33 = vld [vmem:[%s32] sm:%s3]
    %s34 = scalar_lea.vmem [#allocation0], 8
    %35 = vst [vmem:[%s34] sm:%s3] %v33
    %v36 = vld [vmem:[%s0] sm:%s3]
    %37 = vst [vmem:[#allocation0] sm:%s3] %v36
    %v38 = vld [vmem:[#allocation0] ss:$8 sm:$0xf]
    %v39 = vld [vmem:[#allocation0] ss:$8 sm:$0xf0]
    %vm40 = vcmask 1047556
    %v41 = vsel %vm40, %v39, %v38
    %vm42 = vcmask 523264
    %43 = vst.msk [vmem:[%s1] sm:$0xff] %vm42, %v41
    %s44 = scalar_lea.vmem [#allocation0], 64
    %v45 = vld [vmem:[%s44] sm:$0x1]
    %vm46 = vcmask 523264
    %s47 = scalar_lea.vmem %s1, 8
    %48 = vst.msk [vmem:[%s47] sm:$0x1] %vm46, %v45
    %s49 = scalar_lea.vmem [#allocation0], 1
    %v50 = vld [vmem:[%s49] ss:$8 sm:$0xf]
    %s51 = scalar_lea.vmem [#allocation0], 1
    %v52 = vld [vmem:[%s51] ss:$8 sm:$0xf0]
    %vm53 = vcmask 1047556
    %v54 = vsel %vm53, %v52, %v50
    %55 = vrot.lane.b32.xlu0 %v54, 64
    %v56 = vpop.permute.xlu0 %55
    %vm57 = vcmask 1048064
    %58 = vst.msk [vmem:[%s1] sm:$0xff] %vm57, %v56
    %s59 = scalar_lea.vmem [#allocation0], 65
    %v60 = vld [vmem:[%s59] sm:$0x1]
    %61 = vrot.lane.b32.xlu0 %v60, 64
    %v62 = vpop.permute.xlu0 %61
    %vm63 = vcmask 1048064
    %s64 = scalar_lea.vmem %s1, 8
    %65 = vst.msk [vmem:[%s64] sm:$0x1] %vm63, %v62

// kernel: _forward_impl.1
$region0: #{_forward_impl.1}
  #allocation0 [shape = 'u32[]', space=smem, size = 0x4, offset = 0x4, fixed_abs, tag = 'smem constant byte address 0x4 - core index']
  #allocation1 [shape = 'u32[72,128]{1,0:T(1,128)}', space=vmem, size = 0x9000, scoped, tag = 'internal scratch']
  #allocation2 [shape = 'f32[2,512]{1,0:T(2,128)}', space=vmem, size = 0x1000, scoped, tag = 'scratch operand']
  #allocation3 [shape = 'f32[8,160]{1,0:T(8,128)}', space=vmem, size = 0x2000, scoped, tag = 'scratch operand']
  %s0 = inlined_call_operand.vmem [shape: bf16[64,128], index: 0, kind: input, shape index: {}]
  %s1 = inlined_call_operand.vmem [shape: bf16[8,64], index: 1, kind: input, shape index: {}]
  %s2 = inlined_call_operand.vmem [shape: f32[8,1], index: 2, kind: input, shape index: {}]
  %s3 = inlined_call_operand.vmem [shape: f32[512,32], index: 3, kind: input, shape index: {}]
  %s4 = inlined_call_operand.vmem [shape: f32[1,32], index: 4, kind: input, shape index: {}]
  %s5 = inlined_call_operand.vmem [shape: f32[2,16], index: 5, kind: input, shape index: {}]
  %s6 = inlined_call_operand.vmem [shape: f32[16,512], index: 6, kind: input, shape index: {}]
  %s7 = inlined_call_operand.vmem [shape: f32[1,512], index: 7, kind: input, shape index: {}]
  %s8 = inlined_call_operand.vmem [shape: bf16[16,72], index: 8, kind: input, shape index: {}]
  %s9 = inlined_call_operand.vmem [shape: f32[16,1], index: 9, kind: input, shape index: {}]
  %s10 = inlined_call_operand.vmem [shape: f32[9,128], index: 10, kind: input, shape index: {}]
  %s11 = inlined_call_operand.vmem [shape: f32[16,128], index: 11, kind: output, shape index: {0}]
  %s12 = inlined_call_operand.vmem [shape: f32[2,32], index: 12, kind: output, shape index: {1}]
  %13 = xla_tuple %s11, %s12
  %s14 = sld [smem:[#allocation0]]
  $region62: #{_forward_impl.1} parent=0
    _
  %s16 = ssub.s32 1, %s14
  %s17 = scalar_select 0, %s16, %s14
  // Predicated region
  $region2: #{_forward_impl.1} parent=0 // pred_check
    _
  $region3: #{_forward_impl.1} parent=0 // pred_check_branch
    %19 = sbr.rel (0) target = $region5
  $region4: #{_forward_impl.1} parent=0 // pred_region
    _
  $region5: #{_forward_impl.1} parent=0 // pred_fallthru
    _
  // Predicated region
  $region6: #{_forward_impl.1} parent=0 // pred_check
    _
  $region7: #{_forward_impl.1} parent=0 // pred_check_branch
    %21 = sbr.rel (0) target = $region9
  $region8: #{_forward_impl.1} parent=0 // pred_region
    _
  $region9: #{_forward_impl.1} parent=0 // pred_fallthru
    _
  // Predicated region
  $region10: #{_forward_impl.1} parent=0 // pred_check
    _
  $region11: #{_forward_impl.1} parent=0 // pred_check_branch
    %23 = sbr.rel (0) target = $region13
  $region12: #{_forward_impl.1} parent=0 // pred_region
    _
  $region13: #{_forward_impl.1} parent=0 // pred_fallthru
    _
  // Predicated region
  $region14: #{_forward_impl.1} parent=0 // pred_check
    _
  $region15: #{_forward_impl.1} parent=0 // pred_check_branch
    %25 = sbr.rel (0) target = $region17
  $region16: #{_forward_impl.1} parent=0 // pred_region
    _
  $region17: #{_forward_impl.1} parent=0 // pred_fallthru
    _
  // Predicated region
  $region18: #{_forward_impl.1} parent=0 // pred_check
    _
  $region19: #{_forward_impl.1} parent=0 // pred_check_branch
    %27 = sbr.rel (0) target = $region21
  $region20: #{_forward_impl.1} parent=0 // pred_region
    _
  $region21: #{_forward_impl.1} parent=0 // pred_fallthru
    _
  // Predicated region
  $region22: #{_forward_impl.1} parent=0 // pred_check
    _
  $region23: #{_forward_impl.1} parent=0 // pred_check_branch
    %29 = sbr.rel (0) target = $region25
  $region24: #{_forward_impl.1} parent=0 // pred_region
    _
  $region25: #{_forward_impl.1} parent=0 // pred_fallthru
    _
  // Predicated region
  $region26: #{_forward_impl.1} parent=0 // pred_check
    _
  $region27: #{_forward_impl.1} parent=0 // pred_check_branch
    %31 = sbr.rel (0) target = $region29
  $region28: #{_forward_impl.1} parent=0 // pred_region
    _
  $region29: #{_forward_impl.1} parent=0 // pred_fallthru
    _
  // Predicated region
  $region30: #{_forward_impl.1} parent=0 // pred_check
    _
  $region31: #{_forward_impl.1} parent=0 // pred_check_branch
    %33 = sbr.rel (0) target = $region33
  $region32: #{_forward_impl.1} parent=0 // pred_region
    _
  $region33: #{_forward_impl.1} parent=0 // pred_fallthru
    _
  // Predicated region
  $region34: #{_forward_impl.1} parent=0 // pred_check
    _
  $region35: #{_forward_impl.1} parent=0 // pred_check_branch
    %35 = sbr.rel (0) target = $region37
  $region36: #{_forward_impl.1} parent=0 // pred_region
    _
  $region37: #{_forward_impl.1} parent=0 // pred_fallthru
    _
  // Predicated region
  $region38: #{_forward_impl.1} parent=0 // pred_check
    _
  $region39: #{_forward_impl.1} parent=0 // pred_check_branch
    %37 = sbr.rel (0) target = $region41
  $region40: #{_forward_impl.1} parent=0 // pred_region
    _
  $region41: #{_forward_impl.1} parent=0 // pred_fallthru
    _
  // Predicated region
  $region42: #{_forward_impl.1} parent=0 // pred_check
    _
  $region43: #{_forward_impl.1} parent=0 // pred_check_branch
    %39 = sbr.rel (0) target = $region45
  $region44: #{_forward_impl.1} parent=0 // pred_region
    _
  $region45: #{_forward_impl.1} parent=0 // pred_fallthru
    _
  %v41 = vld [vmem:[%s1] sm:$0xf]
  %v42 = vld [vmem:[%s0] sm:$0xf]
  %v43 = vld [vmem:[%s0 + $0x4] sm:$0xf]
  %v44 = vld [vmem:[%s0 + $0x8] sm:$0xf]
  %v45 = vld [vmem:[%s0 + $0xc] sm:$0xf]
  %v46 = vld [vmem:[%s0 + $0x10] sm:$0xf]
  %v47 = vld [vmem:[%s0 + $0x14] sm:$0xf]
  %v48 = vld [vmem:[%s0 + $0x18] sm:$0xf]
  %v49 = vld [vmem:[%s0 + $0x1c] sm:$0xf]
  %v50 = vld [vmem:[%s2] sm:$0xff]
  %52 = vset.pattern.permute.xlu0 0
  %53 = vperm.xlu0 %52, %v50
  %v54 = vpop.permute.xlu0 %53
  %v64 = vunpack.c.l.b16 %v42
  %v65 = vunpack.c.l.b16 %v43
  %v66 = vunpack.c.l.b16 %v44
  %v67 = vunpack.c.l.b16 %v45
  %v68 = vunpack.c.l.b16 %v46
  %v69 = vunpack.c.l.b16 %v47
  %v70 = vunpack.c.l.b16 %v48
  %v71 = vunpack.c.l.b16 %v49
  %v72 = vpack.c.b16 %v65, %v64
  %v73 = vpack.c.b16 %v67, %v66
  %v74 = vpack.c.b16 %v69, %v68
  %v75 = vpack.c.b16 %v71, %v70
  %vm80 = vcmask 523264
  %v82 = vsel %vm80, %v41, 0
  %84 = vmatpush.bf16.msra.mxu0 0
  %85 = vmatpush.bf16.msra.mxu0 0
  %86 = vmatpush.bf16.msra.mxu0 0
  %87 = vmatpush.bf16.msra.mxu0 0
  %88 = vmatpush.bf16.msra.mxu0 %v75
  %89 = vmatpush.bf16.msra.mxu0 %v74
  %90 = vmatpush.bf16.msra.mxu0 %v73
  %91 = vmatpush.bf16.msra.mxu0 %v72
  %92 = vmatmul.bf16.gmra.mxu0 %v82
  %v93 = vpop.f32.mrf.mxu0
  %v94 = vadd.f32 %v54, %v93
  %v95 = vpop.f32.mrf.mxu0
  %96 = vdwg.mxu0
  %v97 = vmax.f32 %v94, 0.0
  %vm98 = vcmask 516096
  %99 = vst.msk [vmem:[#allocation2] sm:$0x1] %vm98, %v97
  %v101 = vrot.slane %v97, 7
  %v102 = vrot.slane %v101, 2
  %103 = vrot.lane.b32.xlu0 %v102, 64
  %v104 = vpop.permute.xlu0 %103
  %vm106 = vcmask 1040896
  %107 = vst.msk [vmem:[#allocation2] sm:$0x1] %vm106, %v104
  %108 = vst.sshfl [vmem:[#allocation1] sm:$0xff pattern:$0x73625140] %v97
  %s109 = scalar_lea.vmem [#allocation1], 1
  %v110 = vld [vmem:[%s109] ss:$4 sm:$0xff]
  %112 = vst.msk [vmem:[#allocation2 + $0x2] sm:$0x1] %vm98, %v110
  %113 = vst.sshfl [vmem:[#allocation1] sm:$0xff pattern:$0x73625140] %v97
  %s114 = scalar_lea.vmem [#allocation1], 1
  %v115 = vld [vmem:[%s114] ss:$4 sm:$0xff]
  %v116 = vrot.slane %v115, 7
  %v117 = vrot.slane %v116, 2
  %118 = vrot.lane.b32.xlu0 %v117, 64
  %v119 = vpop.permute.xlu0 %118
  %121 = vst.msk [vmem:[#allocation2 + $0x2] sm:$0x1] %vm106, %v119
  %122 = vst.sshfl [vmem:[#allocation1] sm:$0xff pattern:$0x73625140] %v97
  %s123 = scalar_lea.vmem [#allocation1], 2
  %v124 = vld [vmem:[%s123] ss:$4 sm:$0xff]
  %126 = vst.msk [vmem:[#allocation2 + $0x4] sm:$0x1] %vm98, %v124
  %127 = vst.sshfl [vmem:[#allocation1] sm:$0xff pattern:$0x73625140] %v97
  %s128 = scalar_lea.vmem [#allocation1], 2
  %v129 = vld [vmem:[%s128] ss:$4 sm:$0xff]
  %v130 = vrot.slane %v129, 7
  %v131 = vrot.slane %v130, 2
  %132 = vrot.lane.b32.xlu0 %v131, 64
  %v133 = vpop.permute.xlu0 %132
  %135 = vst.msk [vmem:[#allocation2 + $0x4] sm:$0x1] %vm106, %v133
  %136 = vst.sshfl [vmem:[#allocation1] sm:$0xff pattern:$0x73625140] %v97
  %s137 = scalar_lea.vmem [#allocation1], 3
  %v138 = vld [vmem:[%s137] ss:$4 sm:$0xff]
  %140 = vst.msk [vmem:[#allocation2 + $0x6] sm:$0x1] %vm98, %v138
  %141 = vst.sshfl [vmem:[#allocation1] sm:$0xff pattern:$0x73625140] %v97
  %s142 = scalar_lea.vmem [#allocation1], 3
  %v143 = vld [vmem:[%s142] ss:$4 sm:$0xff]
  %v144 = vrot.slane %v143, 7
  %v145 = vrot.slane %v144, 2
  %146 = vrot.lane.b32.xlu0 %v145, 64
  %v147 = vpop.permute.xlu0 %146
  %149 = vst.msk [vmem:[#allocation2 + $0x6] sm:$0x1] %vm106, %v147
  %150 = vrot.lane.b32.xlu0 %v97, 64
  %v151 = vpop.permute.xlu0 %150
  %153 = vst.msk [vmem:[#allocation2 + $0x1] sm:$0x1] %vm98, %v151
  %155 = vst.msk [vmem:[#allocation2 + $0x1] sm:$0x1] %vm106, %v102
  %156 = vst.sshfl [vmem:[#allocation1] sm:$0xff pattern:$0x73625140] %v97
  %s157 = scalar_lea.vmem [#allocation1], 1
  %v158 = vld [vmem:[%s157] ss:$4 sm:$0xff]
  %159 = vrot.lane.b32.xlu0 %v158, 64
  %v160 = vpop.permute.xlu0 %159
  %162 = vst.msk [vmem:[#allocation2 + $0x3] sm:$0x1] %vm98, %v160
  %163 = vst.sshfl [vmem:[#allocation1] sm:$0xff pattern:$0x73625140] %v97
  %s164 = scalar_lea.vmem [#allocation1], 1
  %v165 = vld [vmem:[%s164] ss:$4 sm:$0xff]
  %v166 = vrot.slane %v165, 7
  %v167 = vrot.slane %v166, 2
  %169 = vst.msk [vmem:[#allocation2 + $0x3] sm:$0x1] %vm106, %v167
  %170 = vst.sshfl [vmem:[#allocation1] sm:$0xff pattern:$0x73625140] %v97
  %s171 = scalar_lea.vmem [#allocation1], 2
  %v172 = vld [vmem:[%s171] ss:$4 sm:$0xff]
  %173 = vrot.lane.b32.xlu0 %v172, 64
  %v174 = vpop.permute.xlu0 %173
  %176 = vst.msk [vmem:[#allocation2 + $0x5] sm:$0x1] %vm98, %v174
  %177 = vst.sshfl [vmem:[#allocation1] sm:$0xff pattern:$0x73625140] %v97
  %s178 = scalar_lea.vmem [#allocation1], 2
  %v179 = vld [vmem:[%s178] ss:$4 sm:$0xff]
  %v180 = vrot.slane %v179, 7
  %v181 = vrot.slane %v180, 2
  %183 = vst.msk [vmem:[#allocation2 + $0x5] sm:$0x1] %vm106, %v181
  %184 = vst.sshfl [vmem:[#allocation1] sm:$0xff pattern:$0x73625140] %v97
  %s185 = scalar_lea.vmem [#allocation1], 3
  %v186 = vld [vmem:[%s185] ss:$4 sm:$0xff]
  %187 = vrot.lane.b32.xlu0 %v186, 64
  %v188 = vpop.permute.xlu0 %187
  %190 = vst.msk [vmem:[#allocation2 + $0x7] sm:$0x1] %vm98, %v188
  %191 = vst.sshfl [vmem:[#allocation1] sm:$0xff pattern:$0x73625140] %v97
  %s192 = scalar_lea.vmem [#allocation1], 3
  %v193 = vld [vmem:[%s192] ss:$4 sm:$0xff]
  %v194 = vrot.slane %v193, 7
  %v195 = vrot.slane %v194, 2
  %197 = vst.msk [vmem:[#allocation2 + $0x7] sm:$0x1] %vm106, %v195
  %v198 = vld [vmem:[#allocation2] sm:$0xff]
  %v199 = vld [vmem:[%s3] sm:$0xff]
  %v200 = vld [vmem:[%s3 + $0x8] sm:$0xff]
  %v201 = vld [vmem:[%s3 + $0x10] sm:$0xff]
  %v202 = vld [vmem:[%s3 + $0x18] sm:$0xff]
  %v203 = vld [vmem:[%s3 + $0x20] sm:$0xff]
  %v204 = vld [vmem:[%s3 + $0x28] sm:$0xff]
  %v205 = vld [vmem:[%s3 + $0x30] sm:$0xff]
  %v206 = vld [vmem:[%s3 + $0x38] sm:$0xff]
  %v207 = vld [vmem:[%s3 + $0x40] sm:$0xff]
  %v208 = vld [vmem:[%s3 + $0x48] sm:$0xff]
  %v209 = vld [vmem:[%s3 + $0x50] sm:$0xff]
  %v210 = vld [vmem:[%s3 + $0x58] sm:$0xff]
  %v211 = vld [vmem:[%s3 + $0x60] sm:$0xff]
  %v212 = vld [vmem:[%s3 + $0x68] sm:$0xff]
  %v213 = vld [vmem:[%s3 + $0x70] sm:$0xff]
  %v214 = vld [vmem:[%s3 + $0x78] sm:$0xff]
  %v215 = vld [vmem:[%s3 + $0x80] sm:$0xff]
  %v216 = vld [vmem:[%s3 + $0x88] sm:$0xff]
  %v217 = vld [vmem:[%s3 + $0x90] sm:$0xff]
  %v218 = vld [vmem:[%s3 + $0x98] sm:$0xff]
  %v219 = vld [vmem:[%s3 + $0xa0] sm:$0xff]
  %v220 = vld [vmem:[%s3 + $0xa8] sm:$0xff]
  %v221 = vld [vmem:[%s3 + $0xb0] sm:$0xff]
  %v222 = vld [vmem:[%s3 + $0xb8] sm:$0xff]
  %v223 = vld [vmem:[%s3 + $0xc0] sm:$0xff]
  %v224 = vld [vmem:[%s3 + $0xc8] sm:$0xff]
  %v225 = vld [vmem:[%s3 + $0xd0] sm:$0xff]
  %v226 = vld [vmem:[%s3 + $0xd8] sm:$0xff]
  %v227 = vld [vmem:[%s3 + $0xe0] sm:$0xff]
  %v228 = vld [vmem:[%s3 + $0xe8] sm:$0xff]
  %v229 = vld [vmem:[%s3 + $0xf0] sm:$0xff]
  %v230 = vld [vmem:[%s3 + $0xf8] sm:$0xff]
  %v231 = vld [vmem:[%s3 + $0x100] sm:$0xff]
  %v232 = vld [vmem:[%s3 + $0x108] sm:$0xff]
  %v233 = vld [vmem:[%s3 + $0x110] sm:$0xff]
  %v234 = vld [vmem:[%s3 + $0x118] sm:$0xff]
  %v235 = vld [vmem:[%s3 + $0x120] sm:$0xff]
  %v236 = vld [vmem:[%s3 + $0x128] sm:$0xff]
  %v237 = vld [vmem:[%s3 + $0x130] sm:$0xff]
  %v238 = vld [vmem:[%s3 + $0x138] sm:$0xff]
  %v239 = vld [vmem:[%s3 + $0x140] sm:$0xff]
  %v240 = vld [vmem:[%s3 + $0x148] sm:$0xff]
  %v241 = vld [vmem:[%s3 + $0x150] sm:$0xff]
  %v242 = vld [vmem:[%s3 + $0x158] sm:$0xff]
  %v243 = vld [vmem:[%s3 + $0x160] sm:$0xff]
  %v244 = vld [vmem:[%s3 + $0x168] sm:$0xff]
  %v245 = vld [vmem:[%s3 + $0x170] sm:$0xff]
  %v246 = vld [vmem:[%s3 + $0x178] sm:$0xff]
  %v247 = vld [vmem:[%s3 + $0x180] sm:$0xff]
  %v248 = vld [vmem:[%s3 + $0x188] sm:$0xff]
  %v249 = vld [vmem:[%s3 + $0x190] sm:$0xff]
  %v250 = vld [vmem:[%s3 + $0x198] sm:$0xff]
  %v251 = vld [vmem:[%s3 + $0x1a0] sm:$0xff]
  %v252 = vld [vmem:[%s3 + $0x1a8] sm:$0xff]
  %v253 = vld [vmem:[%s3 + $0x1b0] sm:$0xff]
  %v254 = vld [vmem:[%s3 + $0x1b8] sm:$0xff]
  %v255 = vld [vmem:[%s3 + $0x1c0] sm:$0xff]
  %v256 = vld [vmem:[%s3 + $0x1c8] sm:$0xff]
  %v257 = vld [vmem:[%s3 + $0x1d0] sm:$0xff]
  %v258 = vld [vmem:[%s3 + $0x1d8] sm:$0xff]
  %v259 = vld [vmem:[%s3 + $0x1e0] sm:$0xff]
  %v260 = vld [vmem:[%s3 + $0x1e8] sm:$0xff]
  %v261 = vld [vmem:[%s3 + $0x1f0] sm:$0xff]
  %v262 = vld [vmem:[%s3 + $0x1f8] sm:$0xff]
  %v263 = vld [vmem:[%s4] sm:$0x1]
  %v265 = vperm.slane %v263, 0
  %268 = vst [vmem:[#allocation1] ss:$4 sm:$0xff] %v198
  %v269 = vld.sshfl [vmem:[#allocation1] sm:$0xff pattern:$0x73625140]
  %v270 = vld.sshfl [vmem:[#allocation1 + $0x8] sm:$0xff pattern:$0x73625140]
  %v271 = vld.sshfl [vmem:[#allocation1 + $0x10] sm:$0xff pattern:$0x73625140]
  %v272 = vld.sshfl [vmem:[#allocation1 + $0x18] sm:$0xff pattern:$0x73625140]
  %277 = vmatpush.msra.mxu0 %v214
  %278 = vmatpush.msra.mxu0 %v213
  %279 = vmatpush.msra.mxu0 %v212
  %280 = vmatpush.msra.mxu0 %v211
  %281 = vmatpush.msra.mxu0 %v210
  %282 = vmatpush.msra.mxu0 %v209
  %283 = vmatpush.msra.mxu0 %v208
  %284 = vmatpush.msra.mxu0 %v207
  %285 = vmatpush.msra.mxu0 %v206
  %286 = vmatpush.msra.mxu0 %v205
  %287 = vmatpush.msra.mxu0 %v204
  %288 = vmatpush.msra.mxu0 %v203
  %289 = vmatpush.msra.mxu0 %v202
  %290 = vmatpush.msra.mxu0 %v201
  %291 = vmatpush.msra.mxu0 %v200
  %292 = vmatpush.msra.mxu0 %v199
  %293 = vmatmul.f32.gmra.mxu0 %v269
  %v294 = vpop.f32.mrf.mxu0
  %v295 = vadd.f32 %v265, %v294
  %296 = vdwg.mxu0
  %297 = vmatpush.msra.mxu0 %v230
  %298 = vmatpush.msra.mxu0 %v229
  %299 = vmatpush.msra.mxu0 %v228
  %300 = vmatpush.msra.mxu0 %v227
  %301 = vmatpush.msra.mxu0 %v226
  %302 = vmatpush.msra.mxu0 %v225
  %303 = vmatpush.msra.mxu0 %v224
  %304 = vmatpush.msra.mxu0 %v223
  %305 = vmatpush.msra.mxu0 %v222
  %306 = vmatpush.msra.mxu0 %v221
  %307 = vmatpush.msra.mxu0 %v220
  %308 = vmatpush.msra.mxu0 %v219
  %309 = vmatpush.msra.mxu0 %v218
  %310 = vmatpush.msra.mxu0 %v217
  %311 = vmatpush.msra.mxu0 %v216
  %312 = vmatpush.msra.mxu0 %v215
  %313 = vmatmul.f32.gmra.mxu0 %v270
  %v314 = vpop.f32.mrf.mxu0
  %v315 = vadd.f32 %v295, %v314
  %316 = vdwg.mxu0
  %317 = vmatpush.msra.mxu0 %v246
  %318 = vmatpush.msra.mxu0 %v245
  %319 = vmatpush.msra.mxu0 %v244
  %320 = vmatpush.msra.mxu0 %v243
  %321 = vmatpush.msra.mxu0 %v242
  %322 = vmatpush.msra.mxu0 %v241
  %323 = vmatpush.msra.mxu0 %v240
  %324 = vmatpush.msra.mxu0 %v239
  %325 = vmatpush.msra.mxu0 %v238
  %326 = vmatpush.msra.mxu0 %v237
  %327 = vmatpush.msra.mxu0 %v236
  %328 = vmatpush.msra.mxu0 %v235
  %329 = vmatpush.msra.mxu0 %v234
  %330 = vmatpush.msra.mxu0 %v233
  %331 = vmatpush.msra.mxu0 %v232
  %332 = vmatpush.msra.mxu0 %v231
  %333 = vmatmul.f32.gmra.mxu0 %v271
  %v334 = vpop.f32.mrf.mxu0
  %v335 = vadd.f32 %v315, %v334
  %336 = vdwg.mxu0
  %337 = vmatpush.msra.mxu0 %v262
  %338 = vmatpush.msra.mxu0 %v261
  %339 = vmatpush.msra.mxu0 %v260
  %340 = vmatpush.msra.mxu0 %v259
  %341 = vmatpush.msra.mxu0 %v258
  %342 = vmatpush.msra.mxu0 %v257
  %343 = vmatpush.msra.mxu0 %v256
  %344 = vmatpush.msra.mxu0 %v255
  %345 = vmatpush.msra.mxu0 %v254
  %346 = vmatpush.msra.mxu0 %v253
  %347 = vmatpush.msra.mxu0 %v252
  %348 = vmatpush.msra.mxu0 %v251
  %349 = vmatpush.msra.mxu0 %v250
  %350 = vmatpush.msra.mxu0 %v249
  %351 = vmatpush.msra.mxu0 %v248
  %352 = vmatpush.msra.mxu0 %v247
  %353 = vmatmul.f32.gmra.mxu0 %v272
  %v354 = vpop.f32.mrf.mxu0
  %v355 = vadd.f32 %v335, %v354
  %356 = vdwg.mxu0
  %vm357 = vcmask 254976
  %358 = vst.msk [vmem:[%s12] sm:$0x3] %vm357, %v355
  %v359 = vld [vmem:[%s5] sm:$0x3]
  %v360 = vmul.f32 %v355, 0.5
  %v361 = vmul.f32 %v360, 1.442695
  %v362 = vpow.pop %v361
  %364 = vrot.lane.b32.xlu0 %v362, 112
  %v365 = vpop.permute.xlu0 %364
  %v367 = vmul.f32 %v359, %v365
  %v368 = vadd.f32 %v355, %v367
  %v369 = vld [vmem:[%s6] sm:$0xff]
  %v370 = vld [vmem:[%s6 + $0x8] sm:$0xff]
  %v371 = vld [vmem:[%s6 + $0x10] sm:$0xff]
  %v372 = vld [vmem:[%s6 + $0x18] sm:$0xff]
  %v373 = vld [vmem:[%s6 + $0x20] sm:$0xff]
  %v374 = vld [vmem:[%s6 + $0x28] sm:$0xff]
  %v375 = vld [vmem:[%s6 + $0x30] sm:$0xff]
  %v376 = vld [vmem:[%s6 + $0x38] sm:$0xff]
  %v377 = vld [vmem:[%s7] sm:$0xf]
  %v379 = vperm.slane %v377, 0
  %v380 = vperm.slane %v377, 1
  %v381 = vperm.slane %v377, 2
  %v382 = vperm.slane %v377, 3
  %vm387 = vcmask 130048
  %v389 = vsel %vm387, %v368, 0
  %391 = vmatpush.msra.mxu0 0.0
  %392 = vmatpush.msra.mxu0 0.0
  %393 = vmatpush.msra.mxu0 0.0
  %394 = vmatpush.msra.mxu0 0.0
  %395 = vmatpush.msra.mxu0 0.0
  %396 = vmatpush.msra.mxu0 0.0
  %397 = vmatpush.msra.mxu0 0.0
  %398 = vmatpush.msra.mxu0 0.0
  %399 = vmatpush.msra.mxu0 0.0
  %400 = vmatpush.msra.mxu0 0.0
  %401 = vmatpush.msra.mxu0 0.0
  %402 = vmatpush.msra.mxu0 0.0
  %403 = vmatpush.msra.mxu0 0.0
  %404 = vmatpush.msra.mxu0 0.0
  %405 = vmatpush.msra.mxu0 %v373
  %406 = vmatpush.msra.mxu0 %v369
  %407 = vmatmul.f32.gmra.mxu0 %v389
  %v408 = vpop.f32.mrf.mxu0
  %v409 = vadd.f32 %v379, %v408
  %410 = vdwg.mxu0
  %411 = vmatpush.msra.mxu0 0.0
  %412 = vmatpush.msra.mxu0 0.0
  %413 = vmatpush.msra.mxu0 0.0
  %414 = vmatpush.msra.mxu0 0.0
  %415 = vmatpush.msra.mxu0 0.0
  %416 = vmatpush.msra.mxu0 0.0
  %417 = vmatpush.msra.mxu0 0.0
  %418 = vmatpush.msra.mxu0 0.0
  %419 = vmatpush.msra.mxu0 0.0
  %420 = vmatpush.msra.mxu0 0.0
  %421 = vmatpush.msra.mxu0 0.0
  %422 = vmatpush.msra.mxu0 0.0
  %423 = vmatpush.msra.mxu0 0.0
  %424 = vmatpush.msra.mxu0 0.0
  %425 = vmatpush.msra.mxu0 %v374
  %426 = vmatpush.msra.mxu0 %v370
  %427 = vmatmul.f32.gmra.mxu0 %v389
  %v428 = vpop.f32.mrf.mxu0
  %v429 = vadd.f32 %v380, %v428
  %430 = vdwg.mxu0
  %431 = vmatpush.msra.mxu0 0.0
  %432 = vmatpush.msra.mxu0 0.0
  %433 = vmatpush.msra.mxu0 0.0
  %434 = vmatpush.msra.mxu0 0.0
  %435 = vmatpush.msra.mxu0 0.0
  %436 = vmatpush.msra.mxu0 0.0
  %437 = vmatpush.msra.mxu0 0.0
  %438 = vmatpush.msra.mxu0 0.0
  %439 = vmatpush.msra.mxu0 0.0
  %440 = vmatpush.msra.mxu0 0.0
  %441 = vmatpush.msra.mxu0 0.0
  %442 = vmatpush.msra.mxu0 0.0
  %443 = vmatpush.msra.mxu0 0.0
  %444 = vmatpush.msra.mxu0 0.0
  %445 = vmatpush.msra.mxu0 %v375
  %446 = vmatpush.msra.mxu0 %v371
  %447 = vmatmul.f32.gmra.mxu0 %v389
  %v448 = vpop.f32.mrf.mxu0
  %v449 = vadd.f32 %v381, %v448
  %450 = vdwg.mxu0
  %451 = vmatpush.msra.mxu0 0.0
  %452 = vmatpush.msra.mxu0 0.0
  %453 = vmatpush.msra.mxu0 0.0
  %454 = vmatpush.msra.mxu0 0.0
  %455 = vmatpush.msra.mxu0 0.0
  %456 = vmatpush.msra.mxu0 0.0
  %457 = vmatpush.msra.mxu0 0.0
  %458 = vmatpush.msra.mxu0 0.0
  %459 = vmatpush.msra.mxu0 0.0
  %460 = vmatpush.msra.mxu0 0.0
  %461 = vmatpush.msra.mxu0 0.0
  %462 = vmatpush.msra.mxu0 0.0
  %463 = vmatpush.msra.mxu0 0.0
  %464 = vmatpush.msra.mxu0 0.0
  %465 = vmatpush.msra.mxu0 %v376
  %466 = vmatpush.msra.mxu0 %v372
  %467 = vmatmul.f32.gmra.mxu0 %v389
  %v468 = vpop.f32.mrf.mxu0
  %v469 = vadd.f32 %v382, %v468
  %470 = vdwg.mxu0
  %471 = vst [vmem:[#allocation3] sm:$0xff] 0.0
  %vm472 = vcmask 261120
  %473 = vst.msk [vmem:[#allocation3 + $0x8] sm:$0xff] %vm472, 0.0
  %475 = vrot.lane.b32.xlu0 %v409, 16
  %v476 = vpop.permute.xlu0 %475
  %vm478 = vcmask 647296
  %479 = vst.msk [vmem:[#allocation3] sm:$0x1] %vm478, %v476
  %480 = vrot.lane.b32.xlu0 %v409, 80
  %v481 = vpop.permute.xlu0 %480
  %483 = vst.msk [vmem:[#allocation3 + $0x1] sm:$0x1] %vm478, %v481
  %485 = vrot.lane.b32.xlu0 %v429, 16
  %v486 = vpop.permute.xlu0 %485
  %488 = vst.msk [vmem:[#allocation3 + $0x2] sm:$0x1] %vm478, %v486
  %489 = vrot.lane.b32.xlu0 %v429, 80
  %v490 = vpop.permute.xlu0 %489
  %492 = vst.msk [vmem:[#allocation3 + $0x3] sm:$0x1] %vm478, %v490
  %494 = vrot.lane.b32.xlu0 %v449, 16
  %v495 = vpop.permute.xlu0 %494
  %497 = vst.msk [vmem:[#allocation3 + $0x4] sm:$0x1] %vm478, %v495
  %498 = vrot.lane.b32.xlu0 %v449, 80
  %v499 = vpop.permute.xlu0 %498
  %501 = vst.msk [vmem:[#allocation3 + $0x5] sm:$0x1] %vm478, %v499
  %503 = vrot.lane.b32.xlu0 %v469, 16
  %v504 = vpop.permute.xlu0 %503
  %506 = vst.msk [vmem:[#allocation3 + $0x6] sm:$0x1] %vm478, %v504
  %507 = vrot.lane.b32.xlu0 %v469, 80
  %v508 = vpop.permute.xlu0 %507
  %510 = vst.msk [vmem:[#allocation3 + $0x7] sm:$0x1] %vm478, %v508
  %v511 = vrot.slane %v409, 1
  %512 = vrot.lane.b32.xlu0 %v511, 80
  %v513 = vpop.permute.xlu0 %512
  %vm515 = vcmask 1041024
  %516 = vst.msk [vmem:[#allocation3] sm:$0x1] %vm515, %v513
  %vm517 = vcmask 122880
  %518 = vst.msk [vmem:[#allocation3 + $0x8] sm:$0x1] %vm517, %v513
  %519 = vrot.lane.b32.xlu0 %v511, 16
  %v520 = vpop.permute.xlu0 %519
  %522 = vst.msk [vmem:[#allocation3 + $0x1] sm:$0x1] %vm515, %v520
  %523 = vst.msk [vmem:[#allocation3 + $0x9] sm:$0x1] %vm517, %v520
  %v524 = vrot.slane %v429, 1
  %525 = vrot.lane.b32.xlu0 %v524, 80
  %v526 = vpop.permute.xlu0 %525
  %528 = vst.msk [vmem:[#allocation3 + $0x2] sm:$0x1] %vm515, %v526
  %529 = vst.msk [vmem:[#allocation3 + $0xa] sm:$0x1] %vm517, %v526
  %530 = vrot.lane.b32.xlu0 %v524, 16
  %v531 = vpop.permute.xlu0 %530
  %533 = vst.msk [vmem:[#allocation3 + $0x3] sm:$0x1] %vm515, %v531
  %534 = vst.msk [vmem:[#allocation3 + $0xb] sm:$0x1] %vm517, %v531
  %v535 = vrot.slane %v449, 1
  %536 = vrot.lane.b32.xlu0 %v535, 80
  %v537 = vpop.permute.xlu0 %536
  %539 = vst.msk [vmem:[#allocation3 + $0x4] sm:$0x1] %vm515, %v537
  %540 = vst.msk [vmem:[#allocation3 + $0xc] sm:$0x1] %vm517, %v537
  %541 = vrot.lane.b32.xlu0 %v535, 16
  %v542 = vpop.permute.xlu0 %541
  %544 = vst.msk [vmem:[#allocation3 + $0x5] sm:$0x1] %vm515, %v542
  %545 = vst.msk [vmem:[#allocation3 + $0xd] sm:$0x1] %vm517, %v542
  %v546 = vrot.slane %v469, 1
  %547 = vrot.lane.b32.xlu0 %v546, 80
  %v548 = vpop.permute.xlu0 %547
  %550 = vst.msk [vmem:[#allocation3 + $0x6] sm:$0x1] %vm515, %v548
  %551 = vst.msk [vmem:[#allocation3 + $0xe] sm:$0x1] %vm517, %v548
  %552 = vrot.lane.b32.xlu0 %v546, 16
  %v553 = vpop.permute.xlu0 %552
  %555 = vst.msk [vmem:[#allocation3 + $0x7] sm:$0x1] %vm515, %v553
  %556 = vst.msk [vmem:[#allocation3 + $0xf] sm:$0x1] %vm517, %v553
  %v557 = vld [vmem:[#allocation3] sm:$0xff]
  %v558 = vld [vmem:[#allocation3 + $0x8] sm:$0xff]
  %v559 = vld [vmem:[%s10] sm:$0x1]
  %v560 = vperm.slane %v559, 0
  %562 = vrot.lane.b32.xlu0 %v560, 7
  %v563 = vpop.permute.xlu0 %562
  %v565 = vmul.f32 %v557, %v563
  %v566 = vmul.f32 %v558, %v563
  %v567 = vld [vmem:[%s10 + $0x1] sm:$0x1]
  %v568 = vperm.slane %v567, 0
  %570 = vrot.lane.b32.xlu0 %v568, 8
  %v571 = vpop.permute.xlu0 %570
  %v573 = vmul.f32 %v557, %v571
  %v574 = vmul.f32 %v558, %v571
  %v575 = vld [vmem:[%s10 + $0x2] sm:$0x1]
  %v576 = vperm.slane %v575, 0
  %578 = vrot.lane.b32.xlu0 %v576, 9
  %v579 = vpop.permute.xlu0 %578
  %v581 = vmul.f32 %v557, %v579
  %v582 = vmul.f32 %v558, %v579
  %v583 = vld [vmem:[%s10 + $0x3] sm:$0x1]
  %v584 = vperm.slane %v583, 0
  %586 = vrot.lane.b32.xlu0 %v584, 15
  %v587 = vpop.permute.xlu0 %586
  %v589 = vmul.f32 %v557, %v587
  %v590 = vmul.f32 %v558, %v587
  %v591 = vld [vmem:[%s10 + $0x4] sm:$0x1]
  %v592 = vperm.slane %v591, 0
  %594 = vrot.lane.b32.xlu0 %v592, 16
  %v595 = vpop.permute.xlu0 %594
  %v597 = vmul.f32 %v557, %v595
  %v598 = vmul.f32 %v558, %v595
  %v599 = vld [vmem:[%s10 + $0x5] sm:$0x1]
  %v600 = vperm.slane %v599, 0
  %602 = vrot.lane.b32.xlu0 %v600, 17
  %v603 = vpop.permute.xlu0 %602
  %v605 = vmul.f32 %v557, %v603
  %v606 = vmul.f32 %v558, %v603
  %v607 = vld [vmem:[%s10 + $0x6] sm:$0x1]
  %v608 = vperm.slane %v607, 0
  %610 = vrot.lane.b32.xlu0 %v608, 23
  %v611 = vpop.permute.xlu0 %610
  %v613 = vmul.f32 %v557, %v611
  %v614 = vmul.f32 %v558, %v611
  %v615 = vld [vmem:[%s10 + $0x7] sm:$0x1]
  %v616 = vperm.slane %v615, 0
  %618 = vrot.lane.b32.xlu0 %v616, 24
  %v619 = vpop.permute.xlu0 %618
  %v621 = vmul.f32 %v557, %v619
  %v622 = vmul.f32 %v558, %v619
  %v623 = vld [vmem:[%s10 + $0x8] sm:$0x1]
  %v624 = vperm.slane %v623, 0
  %626 = vrot.lane.b32.xlu0 %v624, 25
  %v627 = vpop.permute.xlu0 %626
  %v629 = vmul.f32 %v557, %v627
  %v630 = vmul.f32 %v558, %v627
  %633 = vrot.lane.b32.xlu0 %v573, 127
  %v634 = vpop.permute.xlu0 %633
  %635 = vrot.lane.b32.xlu0 %v574, 127
  %v636 = vpop.permute.xlu0 %635
  %vm637 = vcmask 1039360
  %v638 = vsel %vm637, %v634, %v636
  %643 = vrot.lane.b32.xlu0 %v581, 126
  %v644 = vpop.permute.xlu0 %643
  %645 = vrot.lane.b32.xlu0 %v582, 126
  %v646 = vpop.permute.xlu0 %645
  %vm647 = vcmask 1031168
  %v648 = vsel %vm647, %v644, %v646
  %653 = vrot.lane.b32.xlu0 %v589, 120
  %v654 = vpop.permute.xlu0 %653
  %655 = vrot.lane.b32.xlu0 %v590, 120
  %v656 = vpop.permute.xlu0 %655
  %vm657 = vcmask 982016
  %v658 = vsel %vm657, %v654, %v656
  %663 = vrot.lane.b32.xlu0 %v597, 119
  %v664 = vpop.permute.xlu0 %663
  %665 = vrot.lane.b32.xlu0 %v598, 119
  %v666 = vpop.permute.xlu0 %665
  %vm667 = vcmask 973824
  %v668 = vsel %vm667, %v664, %v666
  %673 = vrot.lane.b32.xlu0 %v605, 118
  %v674 = vpop.permute.xlu0 %673
  %675 = vrot.lane.b32.xlu0 %v606, 118
  %v676 = vpop.permute.xlu0 %675
  %vm677 = vcmask 965632
  %v678 = vsel %vm677, %v674, %v676
  %683 = vrot.lane.b32.xlu0 %v613, 112
  %v684 = vpop.permute.xlu0 %683
  %685 = vrot.lane.b32.xlu0 %v614, 112
  %v686 = vpop.permute.xlu0 %685
  %vm687 = vcmask 916480
  %v688 = vsel %vm687, %v684, %v686
  %693 = vrot.lane.b32.xlu0 %v621, 111
  %v694 = vpop.permute.xlu0 %693
  %695 = vrot.lane.b32.xlu0 %v622, 111
  %v696 = vpop.permute.xlu0 %695
  %vm697 = vcmask 908288
  %v698 = vsel %vm697, %v694, %v696
  %703 = vrot.lane.b32.xlu0 %v629, 110
  %v704 = vpop.permute.xlu0 %703
  %705 = vrot.lane.b32.xlu0 %v630, 110
  %v706 = vpop.permute.xlu0 %705
  %vm707 = vcmask 900096
  %v708 = vsel %vm707, %v704, %v706
  %v711 = vpack.c.bf16 %v638, %v565
  %v712 = vpack.c.bf16 %v636, %v566
  %v713 = vpack.c.bf16 %v658, %v648
  %v714 = vpack.c.bf16 %v656, %v646
  %v715 = vpack.c.bf16 %v678, %v668
  %v716 = vpack.c.bf16 %v676, %v666
  %v717 = vpack.c.bf16 %v698, %v688
  %v718 = vpack.c.bf16 %v696, %v686
  %v719 = vpack.c.bf16 %v708, %v708
  %v720 = vpack.c.bf16 %v706, %v706
  %v721 = vld [vmem:[%s8] sm:$0xf]
  %v722 = vld [vmem:[%s8 + $0x4] sm:$0xf]
  %v723 = vld [vmem:[%s9] sm:$0xff]
  %v724 = vld [vmem:[%s9 + $0x8] sm:$0xff]
  %726 = vset.pattern.permute.xlu0 0
  %727 = vperm.xlu0 %726, %v723
  %v728 = vpop.permute.xlu0 %727
  %731 = vset.pattern.permute.xlu0 0
  %732 = vperm.xlu0 %731, %v724
  %v733 = vpop.permute.xlu0 %732
  %v737 = vunpack.c.l.b16 %v721
  %v738 = vunpack.c.l.b16 %v722
  %v739 = vpack.c.b16 %v738, %v737
  %750 = vrot.lane.b32.xlu0 %v711, 121
  %v751 = vpop.permute.xlu0 %750
  %752 = vrot.lane.b32.xlu0 %v712, 121
  %v753 = vpop.permute.xlu0 %752
  %754 = vrot.lane.b32.xlu0 %v713, 121
  %v755 = vpop.permute.xlu0 %754
  %756 = vrot.lane.b32.xlu0 %v714, 121
  %v757 = vpop.permute.xlu0 %756
  %758 = vrot.lane.b32.xlu0 %v715, 121
  %v759 = vpop.permute.xlu0 %758
  %760 = vrot.lane.b32.xlu0 %v716, 121
  %v761 = vpop.permute.xlu0 %760
  %762 = vrot.lane.b32.xlu0 %v717, 121
  %v763 = vpop.permute.xlu0 %762
  %764 = vrot.lane.b32.xlu0 %v718, 121
  %v765 = vpop.permute.xlu0 %764
  %766 = vrot.lane.b32.xlu0 %v719, 121
  %v767 = vpop.permute.xlu0 %766
  %768 = vrot.lane.b32.xlu0 %v720, 121
  %v769 = vpop.permute.xlu0 %768
  %vm770 = vcmask 990208
  %v771 = vsel %vm770, %v751, %v753
  %v772 = vsel %vm770, %v755, %v757
  %v773 = vsel %vm770, %v759, %v761
  %v774 = vsel %vm770, %v763, %v765
  %v775 = vsel %vm770, %v767, %v769
  %vm780 = vcmask 588800
  %v782 = vsel %vm780, %v739, 0
  %vm784 = vcmask 1043456
  %v786 = vsel %vm784, %v775, 0
  %788 = vmatpush.bf16.msra.mxu0 0
  %789 = vmatpush.bf16.msra.mxu0 0
  %790 = vmatpush.bf16.msra.mxu0 0
  %791 = vmatpush.bf16.msra.mxu0 %v786
  %792 = vmatpush.bf16.msra.mxu0 %v774
  %793 = vmatpush.bf16.msra.mxu0 %v773
  %794 = vmatpush.bf16.msra.mxu0 %v772
  %795 = vmatpush.bf16.msra.mxu0 %v771
  %796 = vmatmul.bf16.gmra.mxu0 %v782
  %v797 = vpop.f32.mrf.mxu0
  %v798 = vadd.f32 %v728, %v797
  %v799 = vpop.f32.mrf.mxu0
  %v800 = vadd.f32 %v733, %v799
  %801 = vdwg.mxu0
  %v802 = vtanh.pop %v798
  %v803 = vtanh.pop %v800
  %804 = vst [vmem:[%s11] sm:$0xff] %v802
  %805 = vst [vmem:[%s11 + $0x8] sm:$0xff] %v803
  // Predicated region
  $region46: #{_forward_impl.1} parent=0 // pred_check
    _
  $region47: #{_forward_impl.1} parent=0 // pred_check_branch
    %807 = sbr.rel (0) target = $region49
  $region48: #{_forward_impl.1} parent=0 // pred_region
    _
  $region49: #{_forward_impl.1} parent=0 // pred_fallthru
    _
  // Predicated region
  $region50: #{_forward_impl.1} parent=0 // pred_check
    _
  $region51: #{_forward_impl.1} parent=0 // pred_check_branch
    %809 = sbr.rel (0) target = $region53
  $region52: #{_forward_impl.1} parent=0 // pred_region
    _
  $region53: #{_forward_impl.1} parent=0 // pred_fallthru
    _
  // Predicated region
  $region54: #{_forward_impl.1} parent=0 // pred_check
    _
  $region55: #{_forward_impl.1} parent=0 // pred_check_branch
    %811 = sbr.rel (0) target = $region57
  $region56: #{_forward_impl.1} parent=0 // pred_region
    _
  $region57: #{_forward_impl.1} parent=0 // pred_fallthru
    _
  // Predicated region
  $region58: #{_forward_impl.1} parent=0 // pred_check
    _
  $region59: #{_forward_impl.1} parent=0 // pred_check_branch
    %813 = sbr.rel (0) target = $region61
  $region60: #{_forward_impl.1} parent=0 // pred_region
    _
  $region61: #{_forward_impl.1} parent=0 // pred_fallthru
    _

</llo_original>
